<compile_context>
chip_gen: v7x
topology: tpu7x:2x2x1
jax: 0.10.0
libtpu: 0.0.40
codegen_flags: <defaults>
</compile_context>

<pallas_src>
import functools
import math

import jax
import jax.numpy as jnp
from jax import lax
from jax.experimental import pallas as pl
from jax.experimental.pallas import tpu as pltpu


# ------------------------- fused MHA forward kernel ------------------------ #
def _mha_fused_kernel(xq_ref, xk_ref, xv_ref,
                      wq_ref, wk_ref, wv_ref, wo_ref,
                      bq_ref, bk_ref, bv_ref, bo_ref,
                      hw_ref,
                      o_ref, e_ref,
                      *, n_heads, head_dim, inv_scale):
    f32 = jnp.float32

    xq = xq_ref[0].astype(f32)                      # [S, H]
    xk = xk_ref[0].astype(f32)                      # [S, H]
    xv = xv_ref[0].astype(f32)                      # [S, H]

    # Fused Q/K/V projections: full-H MXU contractions, lane-dense results.
    q = jnp.dot(xq, wq_ref[...], preferred_element_type=f32) + bq_ref[...]
    k = jnp.dot(xk, wk_ref[...], preferred_element_type=f32) + bk_ref[...]
    v = jnp.dot(xv, wv_ref[...], preferred_element_type=f32) + bv_ref[...]

    outs = []
    for h in range(n_heads):                        # static unroll, small NH
        lo = h * head_dim
        hi = lo + head_dim
        qh = q[:, lo:hi]                            # [S, D]
        kh = k[:, lo:hi]                            # [S, D]
        vh = v[:, lo:hi]                            # [S, D]

        if h == n_heads - 1:
            # Last head only: Q1 = Q1 @ weight (per-batch random [D, D]).
            qh = jnp.dot(qh, hw_ref[0], preferred_element_type=f32)

        # energy = (Q @ K^T) / scale  (dot_general avoids an explicit K^T).
        scores = lax.dot_general(
            qh, kh, dimension_numbers=(((1,), (1,)), ((), ())),
            preferred_element_type=f32) * inv_scale

        if h == n_heads - 1:
            e_ref[0] = scores                       # energy1 (post-scale)

        # softmax over the last dim (no mask in the reference usage).
        m = jnp.max(scores, axis=-1, keepdims=True)
        p = jnp.exp(scores - m)
        denom = jnp.sum(p, axis=-1, keepdims=True)
        attn = p * pl.reciprocal(denom, approx=True)

        # dropout(attention) with p=0.2 is identity in eval mode.
        outs.append(jnp.dot(attn, vh, preferred_element_type=f32))

    # cat([heads 0..NH-2, last head], dim=-1) == original head order.
    x = jnp.concatenate(outs, axis=-1)              # [S, H]

    # fc_o fused in the same kernel.
    o_ref[0] = (jnp.dot(x, wo_ref[...], preferred_element_type=f32)
                + bo_ref[...]).astype(o_ref.dtype)


# ------------------------------- wrapper ----------------------------------- #
def multi_head_attention_forward(params, query, key, value, *, weight_key):
    """Returns (x, energy1) exactly like the PyTorch module's forward."""
    B, S, H = query.shape
    NH = params["n_heads"]
    D = H // NH
    inv_scale = 1.0 / math.sqrt(float(D))

    # The PyTorch forward draws nn.Parameter(torch.randn(B, 1, D, D)) fresh on
    # every call; mirror that by drawing per call from the provided key.
    head_weight = jax.random.normal(weight_key, (B, D, D), jnp.float32)

    kern = functools.partial(_mha_fused_kernel, n_heads=NH, head_dim=D,
                             inv_scale=inv_scale)

    x_spec = pl.BlockSpec((1, S, H), lambda b: (b, 0, 0))
    w_spec = pl.BlockSpec((H, H), lambda b: (0, 0))     # block idx constant ->
    b_spec = pl.BlockSpec((1, H), lambda b: (0, 0))     # stays resident in VMEM
    hw_spec = pl.BlockSpec((1, D, D), lambda b: (b, 0, 0))

    x, energy1 = pl.pallas_call(
        kern,
        grid=(B,),
        in_specs=[x_spec, x_spec, x_spec,
                  w_spec, w_spec, w_spec, w_spec,
                  b_spec, b_spec, b_spec, b_spec,
                  hw_spec],
        out_specs=(pl.BlockSpec((1, S, H), lambda b: (b, 0, 0)),
                   pl.BlockSpec((1, S, S), lambda b: (b, 0, 0))),
        out_shape=(jax.ShapeDtypeStruct((B, S, H), jnp.float32),
                   jax.ShapeDtypeStruct((B, S, S), jnp.float32)),
        compiler_params=pltpu.CompilerParams(
            dimension_semantics=("parallel",),
            vmem_limit_bytes=32 * 1024 * 1024),
    )(query, key, value,
      params["wq"], params["wk"], params["wv"], params["wo"],
      params["bq"].reshape(1, H), params["bk"].reshape(1, H),
      params["bv"].reshape(1, H), params["bo"].reshape(1, H),
      head_weight)

    return x, energy1.reshape(B, 1, S, S)


def init_params(key, hid_dim, n_heads):
    ks = jax.random.split(key, 8)
    s = 1.0 / math.sqrt(hid_dim)

    def lin(kw, kb):
        w = jax.random.uniform(kw, (hid_dim, hid_dim), jnp.float32, -s, s)
        b = jax.random.uniform(kb, (hid_dim,), jnp.float32, -s, s)
        return w, b

    wq, bq = lin(ks[0], ks[1])
    wk, bk = lin(ks[2], ks[3])
    wv, bv = lin(ks[4], ks[5])
    wo, bo = lin(ks[6], ks[7])
    return dict(n_heads=n_heads, wq=wq, bq=bq, wk=wk, bk=bk, wv=wv, bv=bv,
                wo=wo, bo=bo)


if __name__ == "__main__":
    B, S, HID, NH = 2, 8, 32, 4   # hid_dim % n_heads == 0, head_dim = 8

    key = jax.random.PRNGKey(0)
    kp, kw, kq, kk, kv = jax.random.split(key, 5)
    params = init_params(kp, HID, NH)

    query = jax.random.normal(kq, (B, S, HID), jnp.float32)
    key_t = jax.random.normal(kk, (B, S, HID), jnp.float32)
    value = jax.random.normal(kv, (B, S, HID), jnp.float32)

    x, energy1 = multi_head_attention_forward(params, query, key_t, value,
                                              weight_key=kw)
    jax.block_until_ready((x, energy1))

    assert x.shape == (B, S, HID), x.shape
    assert energy1.shape == (B, 1, S, S), energy1.shape
    print("KERNEL_OK")
</pallas_src>

<mosaic_0001>
module attributes {stable_mosaic.version = 11 : i64} {
  func.func @_mha_fused_kernel(%arg0: i32, %arg1: memref<1x8x32xf32, #tpu.memory_space<vmem>>, %arg2: memref<1x8x32xf32, #tpu.memory_space<vmem>>, %arg3: memref<1x8x32xf32, #tpu.memory_space<vmem>>, %arg4: memref<32x32xf32, #tpu.memory_space<vmem>>, %arg5: memref<32x32xf32, #tpu.memory_space<vmem>>, %arg6: memref<32x32xf32, #tpu.memory_space<vmem>>, %arg7: memref<32x32xf32, #tpu.memory_space<vmem>>, %arg8: memref<1x32xf32, #tpu.memory_space<vmem>>, %arg9: memref<1x32xf32, #tpu.memory_space<vmem>>, %arg10: memref<1x32xf32, #tpu.memory_space<vmem>>, %arg11: memref<1x32xf32, #tpu.memory_space<vmem>>, %arg12: memref<1x8x8xf32, #tpu.memory_space<vmem>>, %arg13: memref<1x8x32xf32, #tpu.memory_space<vmem>>, %arg14: memref<1x8x8xf32, #tpu.memory_space<vmem>>) attributes {dimension_semantics = [#tpu.dimension_semantics<parallel>], iteration_bounds = array<i64: 2>, scalar_prefetch = 0 : i64, scratch_operands = 0 : i64, tpu.core_type = #tpu.core_type<tc>, window_params = [{transform_indices = @transform_0, window_bounds = array<i64: 1, 8, 32>}, {transform_indices = @transform_1, window_bounds = array<i64: 1, 8, 32>}, {transform_indices = @transform_2, window_bounds = array<i64: 1, 8, 32>}, {pipeline_mode = #tpu.pipeline_mode<synchronous>, transform_indices = @transform_3, window_bounds = array<i64: 32, 32>}, {pipeline_mode = #tpu.pipeline_mode<synchronous>, transform_indices = @transform_4, window_bounds = array<i64: 32, 32>}, {pipeline_mode = #tpu.pipeline_mode<synchronous>, transform_indices = @transform_5, window_bounds = array<i64: 32, 32>}, {pipeline_mode = #tpu.pipeline_mode<synchronous>, transform_indices = @transform_6, window_bounds = array<i64: 32, 32>}, {pipeline_mode = #tpu.pipeline_mode<synchronous>, transform_indices = @transform_7, window_bounds = array<i64: 1, 32>}, {pipeline_mode = #tpu.pipeline_mode<synchronous>, transform_indices = @transform_8, window_bounds = array<i64: 1, 32>}, {pipeline_mode = #tpu.pipeline_mode<synchronous>, transform_indices = @transform_9, window_bounds = array<i64: 1, 32>}, {pipeline_mode = #tpu.pipeline_mode<synchronous>, transform_indices = @transform_10, window_bounds = array<i64: 1, 32>}, {transform_indices = @transform_11, window_bounds = array<i64: 1, 8, 8>}, {transform_indices = @transform_12, window_bounds = array<i64: 1, 8, 32>}, {transform_indices = @transform_13, window_bounds = array<i64: 1, 8, 8>}]} {
    %c0 = arith.constant 0 : index
    %c0_0 = arith.constant 0 : index
    %c0_1 = arith.constant 0 : index
    %0 = vector.load %arg1[%c0, %c0_0, %c0_1] : memref<1x8x32xf32, #tpu.memory_space<vmem>>, vector<1x8x32xf32>
    %1 = vector.shape_cast %0 : vector<1x8x32xf32> to vector<8x32xf32>
    %c0_2 = arith.constant 0 : index
    %c0_3 = arith.constant 0 : index
    %c0_4 = arith.constant 0 : index
    %2 = vector.load %arg2[%c0_2, %c0_3, %c0_4] : memref<1x8x32xf32, #tpu.memory_space<vmem>>, vector<1x8x32xf32>
    %3 = vector.shape_cast %2 : vector<1x8x32xf32> to vector<8x32xf32>
    %c0_5 = arith.constant 0 : index
    %c0_6 = arith.constant 0 : index
    %c0_7 = arith.constant 0 : index
    %4 = vector.load %arg3[%c0_5, %c0_6, %c0_7] : memref<1x8x32xf32, #tpu.memory_space<vmem>>, vector<1x8x32xf32>
    %5 = vector.shape_cast %4 : vector<1x8x32xf32> to vector<8x32xf32>
    %c0_8 = arith.constant 0 : index
    %c0_9 = arith.constant 0 : index
    %6 = vector.load %arg4[%c0_8, %c0_9] : memref<32x32xf32, #tpu.memory_space<vmem>>, vector<32x32xf32>
    %cst = arith.constant dense<0.000000e+00> : vector<8x32xf32>
    %7 = tpu.matmul %1, %6, %cst {dimension_numbers = #tpu.dot_dimension_numbers<[1], [0], [0], [1], [0, 0, 1, 1], [], []>} : vector<8x32xf32>, vector<32x32xf32>, vector<8x32xf32> -> vector<8x32xf32>
    %c0_10 = arith.constant 0 : index
    %c0_11 = arith.constant 0 : index
    %8 = vector.load %arg8[%c0_10, %c0_11] : memref<1x32xf32, #tpu.memory_space<vmem>>, vector<1x32xf32>
    %9 = vector.broadcast %8 : vector<1x32xf32> to vector<8x32xf32>
    %10 = arith.addf %7, %9 : vector<8x32xf32>
    %c0_12 = arith.constant 0 : index
    %c0_13 = arith.constant 0 : index
    %11 = vector.load %arg5[%c0_12, %c0_13] : memref<32x32xf32, #tpu.memory_space<vmem>>, vector<32x32xf32>
    %cst_14 = arith.constant dense<0.000000e+00> : vector<8x32xf32>
    %12 = tpu.matmul %3, %11, %cst_14 {dimension_numbers = #tpu.dot_dimension_numbers<[1], [0], [0], [1], [0, 0, 1, 1], [], []>} : vector<8x32xf32>, vector<32x32xf32>, vector<8x32xf32> -> vector<8x32xf32>
    %c0_15 = arith.constant 0 : index
    %c0_16 = arith.constant 0 : index
    %13 = vector.load %arg9[%c0_15, %c0_16] : memref<1x32xf32, #tpu.memory_space<vmem>>, vector<1x32xf32>
    %14 = vector.broadcast %13 : vector<1x32xf32> to vector<8x32xf32>
    %15 = arith.addf %12, %14 : vector<8x32xf32>
    %c0_17 = arith.constant 0 : index
    %c0_18 = arith.constant 0 : index
    %16 = vector.load %arg6[%c0_17, %c0_18] : memref<32x32xf32, #tpu.memory_space<vmem>>, vector<32x32xf32>
    %cst_19 = arith.constant dense<0.000000e+00> : vector<8x32xf32>
    %17 = tpu.matmul %5, %16, %cst_19 {dimension_numbers = #tpu.dot_dimension_numbers<[1], [0], [0], [1], [0, 0, 1, 1], [], []>} : vector<8x32xf32>, vector<32x32xf32>, vector<8x32xf32> -> vector<8x32xf32>
    %c0_20 = arith.constant 0 : index
    %c0_21 = arith.constant 0 : index
    %18 = vector.load %arg10[%c0_20, %c0_21] : memref<1x32xf32, #tpu.memory_space<vmem>>, vector<1x32xf32>
    %19 = vector.broadcast %18 : vector<1x32xf32> to vector<8x32xf32>
    %20 = arith.addf %17, %19 : vector<8x32xf32>
    %21 = vector.extract_strided_slice %10 {offsets = [0, 0], sizes = [8, 8], strides = [1, 1]} : vector<8x32xf32> to vector<8x8xf32>
    %22 = vector.extract_strided_slice %15 {offsets = [0, 0], sizes = [8, 8], strides = [1, 1]} : vector<8x32xf32> to vector<8x8xf32>
    %23 = vector.extract_strided_slice %20 {offsets = [0, 0], sizes = [8, 8], strides = [1, 1]} : vector<8x32xf32> to vector<8x8xf32>
    %cst_22 = arith.constant dense<0.000000e+00> : vector<8x8xf32>
    %24 = tpu.matmul %21, %22, %cst_22 {dimension_numbers = #tpu.dot_dimension_numbers<[1], [1], [0], [0], [0, 0, 1, 0], [], []>} : vector<8x8xf32>, vector<8x8xf32>, vector<8x8xf32> -> vector<8x8xf32>
    %cst_23 = arith.constant 0.353553385 : f32
    %25 = vector.broadcast %cst_23 : f32 to vector<8x8xf32>
    %26 = arith.mulf %24, %25 : vector<8x8xf32>
    %cst_24 = arith.constant dense<0xFF800000> : vector<8xf32>
    %27 = vector.multi_reduction <maximumf>, %26, %cst_24 [1] : vector<8x8xf32> to vector<8xf32>
    %28 = vector.shape_cast %27 : vector<8xf32> to vector<8x1xf32>
    %29 = vector.broadcast %28 : vector<8x1xf32> to vector<8x8xf32>
    %30 = arith.subf %26, %29 : vector<8x8xf32>
    %31 = math.exp %30 : vector<8x8xf32>
    %cst_25 = arith.constant dense<0.000000e+00> : vector<8xf32>
    %32 = vector.multi_reduction <add>, %31, %cst_25 [1] : vector<8x8xf32> to vector<8xf32>
    %33 = vector.shape_cast %32 : vector<8xf32> to vector<8x1xf32>
    %34 = tpu.reciprocal %33 {approx = true} : vector<8x1xf32> -> vector<8x1xf32>
    %35 = vector.broadcast %34 : vector<8x1xf32> to vector<8x8xf32>
    %36 = arith.mulf %31, %35 : vector<8x8xf32>
    %cst_26 = arith.constant dense<0.000000e+00> : vector<8x8xf32>
    %37 = tpu.matmul %36, %23, %cst_26 {dimension_numbers = #tpu.dot_dimension_numbers<[1], [0], [0], [1], [0, 0, 1, 1], [], []>} : vector<8x8xf32>, vector<8x8xf32>, vector<8x8xf32> -> vector<8x8xf32>
    %38 = vector.extract_strided_slice %10 {offsets = [0, 8], sizes = [8, 8], strides = [1, 1]} : vector<8x32xf32> to vector<8x8xf32>
    %39 = vector.extract_strided_slice %15 {offsets = [0, 8], sizes = [8, 8], strides = [1, 1]} : vector<8x32xf32> to vector<8x8xf32>
    %40 = vector.extract_strided_slice %20 {offsets = [0, 8], sizes = [8, 8], strides = [1, 1]} : vector<8x32xf32> to vector<8x8xf32>
    %cst_27 = arith.constant dense<0.000000e+00> : vector<8x8xf32>
    %41 = tpu.matmul %38, %39, %cst_27 {dimension_numbers = #tpu.dot_dimension_numbers<[1], [1], [0], [0], [0, 0, 1, 0], [], []>} : vector<8x8xf32>, vector<8x8xf32>, vector<8x8xf32> -> vector<8x8xf32>
    %cst_28 = arith.constant 0.353553385 : f32
    %42 = vector.broadcast %cst_28 : f32 to vector<8x8xf32>
    %43 = arith.mulf %41, %42 : vector<8x8xf32>
    %cst_29 = arith.constant dense<0xFF800000> : vector<8xf32>
    %44 = vector.multi_reduction <maximumf>, %43, %cst_29 [1] : vector<8x8xf32> to vector<8xf32>
    %45 = vector.shape_cast %44 : vector<8xf32> to vector<8x1xf32>
    %46 = vector.broadcast %45 : vector<8x1xf32> to vector<8x8xf32>
    %47 = arith.subf %43, %46 : vector<8x8xf32>
    %48 = math.exp %47 : vector<8x8xf32>
    %cst_30 = arith.constant dense<0.000000e+00> : vector<8xf32>
    %49 = vector.multi_reduction <add>, %48, %cst_30 [1] : vector<8x8xf32> to vector<8xf32>
    %50 = vector.shape_cast %49 : vector<8xf32> to vector<8x1xf32>
    %51 = tpu.reciprocal %50 {approx = true} : vector<8x1xf32> -> vector<8x1xf32>
    %52 = vector.broadcast %51 : vector<8x1xf32> to vector<8x8xf32>
    %53 = arith.mulf %48, %52 : vector<8x8xf32>
    %cst_31 = arith.constant dense<0.000000e+00> : vector<8x8xf32>
    %54 = tpu.matmul %53, %40, %cst_31 {dimension_numbers = #tpu.dot_dimension_numbers<[1], [0], [0], [1], [0, 0, 1, 1], [], []>} : vector<8x8xf32>, vector<8x8xf32>, vector<8x8xf32> -> vector<8x8xf32>
    %55 = vector.extract_strided_slice %10 {offsets = [0, 16], sizes = [8, 8], strides = [1, 1]} : vector<8x32xf32> to vector<8x8xf32>
    %56 = vector.extract_strided_slice %15 {offsets = [0, 16], sizes = [8, 8], strides = [1, 1]} : vector<8x32xf32> to vector<8x8xf32>
    %57 = vector.extract_strided_slice %20 {offsets = [0, 16], sizes = [8, 8], strides = [1, 1]} : vector<8x32xf32> to vector<8x8xf32>
    %cst_32 = arith.constant dense<0.000000e+00> : vector<8x8xf32>
    %58 = tpu.matmul %55, %56, %cst_32 {dimension_numbers = #tpu.dot_dimension_numbers<[1], [1], [0], [0], [0, 0, 1, 0], [], []>} : vector<8x8xf32>, vector<8x8xf32>, vector<8x8xf32> -> vector<8x8xf32>
    %cst_33 = arith.constant 0.353553385 : f32
    %59 = vector.broadcast %cst_33 : f32 to vector<8x8xf32>
    %60 = arith.mulf %58, %59 : vector<8x8xf32>
    %cst_34 = arith.constant dense<0xFF800000> : vector<8xf32>
    %61 = vector.multi_reduction <maximumf>, %60, %cst_34 [1] : vector<8x8xf32> to vector<8xf32>
    %62 = vector.shape_cast %61 : vector<8xf32> to vector<8x1xf32>
    %63 = vector.broadcast %62 : vector<8x1xf32> to vector<8x8xf32>
    %64 = arith.subf %60, %63 : vector<8x8xf32>
    %65 = math.exp %64 : vector<8x8xf32>
    %cst_35 = arith.constant dense<0.000000e+00> : vector<8xf32>
    %66 = vector.multi_reduction <add>, %65, %cst_35 [1] : vector<8x8xf32> to vector<8xf32>
    %67 = vector.shape_cast %66 : vector<8xf32> to vector<8x1xf32>
    %68 = tpu.reciprocal %67 {approx = true} : vector<8x1xf32> -> vector<8x1xf32>
    %69 = vector.broadcast %68 : vector<8x1xf32> to vector<8x8xf32>
    %70 = arith.mulf %65, %69 : vector<8x8xf32>
    %cst_36 = arith.constant dense<0.000000e+00> : vector<8x8xf32>
    %71 = tpu.matmul %70, %57, %cst_36 {dimension_numbers = #tpu.dot_dimension_numbers<[1], [0], [0], [1], [0, 0, 1, 1], [], []>} : vector<8x8xf32>, vector<8x8xf32>, vector<8x8xf32> -> vector<8x8xf32>
    %72 = vector.extract_strided_slice %10 {offsets = [0, 24], sizes = [8, 8], strides = [1, 1]} : vector<8x32xf32> to vector<8x8xf32>
    %73 = vector.extract_strided_slice %15 {offsets = [0, 24], sizes = [8, 8], strides = [1, 1]} : vector<8x32xf32> to vector<8x8xf32>
    %74 = vector.extract_strided_slice %20 {offsets = [0, 24], sizes = [8, 8], strides = [1, 1]} : vector<8x32xf32> to vector<8x8xf32>
    %c0_37 = arith.constant 0 : index
    %c0_38 = arith.constant 0 : index
    %c0_39 = arith.constant 0 : index
    %75 = vector.load %arg12[%c0_37, %c0_38, %c0_39] : memref<1x8x8xf32, #tpu.memory_space<vmem>>, vector<1x8x8xf32>
    %76 = vector.shape_cast %75 : vector<1x8x8xf32> to vector<8x8xf32>
    %cst_40 = arith.constant dense<0.000000e+00> : vector<8x8xf32>
    %77 = tpu.matmul %72, %76, %cst_40 {dimension_numbers = #tpu.dot_dimension_numbers<[1], [0], [0], [1], [0, 0, 1, 1], [], []>} : vector<8x8xf32>, vector<8x8xf32>, vector<8x8xf32> -> vector<8x8xf32>
    %cst_41 = arith.constant dense<0.000000e+00> : vector<8x8xf32>
    %78 = tpu.matmul %77, %73, %cst_41 {dimension_numbers = #tpu.dot_dimension_numbers<[1], [1], [0], [0], [0, 0, 1, 0], [], []>} : vector<8x8xf32>, vector<8x8xf32>, vector<8x8xf32> -> vector<8x8xf32>
    %cst_42 = arith.constant 0.353553385 : f32
    %79 = vector.broadcast %cst_42 : f32 to vector<8x8xf32>
    %80 = arith.mulf %78, %79 : vector<8x8xf32>
    %c0_43 = arith.constant 0 : index
    %c0_44 = arith.constant 0 : index
    %c0_45 = arith.constant 0 : index
    %81 = vector.load %arg14[%c0_43, %c0_44, %c0_45] : memref<1x8x8xf32, #tpu.memory_space<vmem>>, vector<1x8x8xf32>
    %82 = vector.shape_cast %81 : vector<1x8x8xf32> to vector<8x8xf32>
    %83 = vector.shape_cast %80 : vector<8x8xf32> to vector<1x8x8xf32>
    tpu.vector_store %arg14[%c0_43, %c0_44, %c0_45], %83 {strides = array<i32>} : memref<1x8x8xf32, #tpu.memory_space<vmem>>, vector<1x8x8xf32>,
    %cst_46 = arith.constant dense<0xFF800000> : vector<8xf32>
    %84 = vector.multi_reduction <maximumf>, %80, %cst_46 [1] : vector<8x8xf32> to vector<8xf32>
    %85 = vector.shape_cast %84 : vector<8xf32> to vector<8x1xf32>
    %86 = vector.broadcast %85 : vector<8x1xf32> to vector<8x8xf32>
    %87 = arith.subf %80, %86 : vector<8x8xf32>
    %88 = math.exp %87 : vector<8x8xf32>
    %cst_47 = arith.constant dense<0.000000e+00> : vector<8xf32>
    %89 = vector.multi_reduction <add>, %88, %cst_47 [1] : vector<8x8xf32> to vector<8xf32>
    %90 = vector.shape_cast %89 : vector<8xf32> to vector<8x1xf32>
    %91 = tpu.reciprocal %90 {approx = true} : vector<8x1xf32> -> vector<8x1xf32>
    %92 = vector.broadcast %91 : vector<8x1xf32> to vector<8x8xf32>
    %93 = arith.mulf %88, %92 : vector<8x8xf32>
    %cst_48 = arith.constant dense<0.000000e+00> : vector<8x8xf32>
    %94 = tpu.matmul %93, %74, %cst_48 {dimension_numbers = #tpu.dot_dimension_numbers<[1], [0], [0], [1], [0, 0, 1, 1], [], []>} : vector<8x8xf32>, vector<8x8xf32>, vector<8x8xf32> -> vector<8x8xf32>
    %95 = tpu.concatenate %37, %54, %71, %94 in 1 : vector<8x8xf32>, vector<8x8xf32>, vector<8x8xf32>, vector<8x8xf32> -> vector<8x32xf32>
    %c0_49 = arith.constant 0 : index
    %c0_50 = arith.constant 0 : index
    %96 = vector.load %arg7[%c0_49, %c0_50] : memref<32x32xf32, #tpu.memory_space<vmem>>, vector<32x32xf32>
    %cst_51 = arith.constant dense<0.000000e+00> : vector<8x32xf32>
    %97 = tpu.matmul %95, %96, %cst_51 {dimension_numbers = #tpu.dot_dimension_numbers<[1], [0], [0], [1], [0, 0, 1, 1], [], []>} : vector<8x32xf32>, vector<32x32xf32>, vector<8x32xf32> -> vector<8x32xf32>
    %c0_52 = arith.constant 0 : index
    %c0_53 = arith.constant 0 : index
    %98 = vector.load %arg11[%c0_52, %c0_53] : memref<1x32xf32, #tpu.memory_space<vmem>>, vector<1x32xf32>
    %99 = vector.broadcast %98 : vector<1x32xf32> to vector<8x32xf32>
    %100 = arith.addf %97, %99 : vector<8x32xf32>
    %c0_54 = arith.constant 0 : index
    %c0_55 = arith.constant 0 : index
    %c0_56 = arith.constant 0 : index
    %101 = vector.load %arg13[%c0_54, %c0_55, %c0_56] : memref<1x8x32xf32, #tpu.memory_space<vmem>>, vector<1x8x32xf32>
    %102 = vector.shape_cast %101 : vector<1x8x32xf32> to vector<8x32xf32>
    %103 = vector.shape_cast %100 : vector<8x32xf32> to vector<1x8x32xf32>
    tpu.vector_store %arg13[%c0_54, %c0_55, %c0_56], %103 {strides = array<i32>} : memref<1x8x32xf32, #tpu.memory_space<vmem>>, vector<1x8x32xf32>,
    return
  }
  func.func @transform_0(%arg0: i32) -> (i32, i32, i32) {
    %c0_i32 = arith.constant 0 : i32
    %c0_i32_0 = arith.constant 0 : i32
    %c0_i32_1 = arith.constant 0 : i32
    return %arg0, %c0_i32, %c0_i32_0 : i32, i32, i32
  }
  func.func @transform_1(%arg0: i32) -> (i32, i32, i32) {
    %c0_i32 = arith.constant 0 : i32
    %c0_i32_0 = arith.constant 0 : i32
    %c0_i32_1 = arith.constant 0 : i32
    return %arg0, %c0_i32, %c0_i32_0 : i32, i32, i32
  }
  func.func @transform_2(%arg0: i32) -> (i32, i32, i32) {
    %c0_i32 = arith.constant 0 : i32
    %c0_i32_0 = arith.constant 0 : i32
    %c0_i32_1 = arith.constant 0 : i32
    return %arg0, %c0_i32, %c0_i32_0 : i32, i32, i32
  }
  func.func @transform_3(%arg0: i32) -> (i32, i32) {
    %c0_i32 = arith.constant 0 : i32
    %c0_i32_0 = arith.constant 0 : i32
    %c0_i32_1 = arith.constant 0 : i32
    return %c0_i32, %c0_i32_0 : i32, i32
  }
  func.func @transform_4(%arg0: i32) -> (i32, i32) {
    %c0_i32 = arith.constant 0 : i32
    %c0_i32_0 = arith.constant 0 : i32
    %c0_i32_1 = arith.constant 0 : i32
    return %c0_i32, %c0_i32_0 : i32, i32
  }
  func.func @transform_5(%arg0: i32) -> (i32, i32) {
    %c0_i32 = arith.constant 0 : i32
    %c0_i32_0 = arith.constant 0 : i32
    %c0_i32_1 = arith.constant 0 : i32
    return %c0_i32, %c0_i32_0 : i32, i32
  }
  func.func @transform_6(%arg0: i32) -> (i32, i32) {
    %c0_i32 = arith.constant 0 : i32
    %c0_i32_0 = arith.constant 0 : i32
    %c0_i32_1 = arith.constant 0 : i32
    return %c0_i32, %c0_i32_0 : i32, i32
  }
  func.func @transform_7(%arg0: i32) -> (i32, i32) {
    %c0_i32 = arith.constant 0 : i32
    %c0_i32_0 = arith.constant 0 : i32
    %c0_i32_1 = arith.constant 0 : i32
    return %c0_i32, %c0_i32_0 : i32, i32
  }
  func.func @transform_8(%arg0: i32) -> (i32, i32) {
    %c0_i32 = arith.constant 0 : i32
    %c0_i32_0 = arith.constant 0 : i32
    %c0_i32_1 = arith.constant 0 : i32
    return %c0_i32, %c0_i32_0 : i32, i32
  }
  func.func @transform_9(%arg0: i32) -> (i32, i32) {
    %c0_i32 = arith.constant 0 : i32
    %c0_i32_0 = arith.constant 0 : i32
    %c0_i32_1 = arith.constant 0 : i32
    return %c0_i32, %c0_i32_0 : i32, i32
  }
  func.func @transform_10(%arg0: i32) -> (i32, i32) {
    %c0_i32 = arith.constant 0 : i32
    %c0_i32_0 = arith.constant 0 : i32
    %c0_i32_1 = arith.constant 0 : i32
    return %c0_i32, %c0_i32_0 : i32, i32
  }
  func.func @transform_11(%arg0: i32) -> (i32, i32, i32) {
    %c0_i32 = arith.constant 0 : i32
    %c0_i32_0 = arith.constant 0 : i32
    %c0_i32_1 = arith.constant 0 : i32
    return %arg0, %c0_i32, %c0_i32_0 : i32, i32, i32
  }
  func.func @transform_12(%arg0: i32) -> (i32, i32, i32) {
    %c0_i32 = arith.constant 0 : i32
    %c0_i32_0 = arith.constant 0 : i32
    %c0_i32_1 = arith.constant 0 : i32
    return %arg0, %c0_i32, %c0_i32_0 : i32, i32, i32
  }
  func.func @transform_13(%arg0: i32) -> (i32, i32, i32) {
    %c0_i32 = arith.constant 0 : i32
    %c0_i32_0 = arith.constant 0 : i32
    %c0_i32_1 = arith.constant 0 : i32
    return %arg0, %c0_i32, %c0_i32_0 : i32, i32, i32
  }
}

</mosaic_0001>

<llo_original>
// kernel: tpu_custom_call.1
$region0: #{tpu_custom_call.1}
  #allocation0 [shape = 'u32[]', space=smem, size = 0x4, offset = 0x4, fixed_abs, tag = 'smem constant byte address 0x4 - core index']
  #allocation1 [shape = 'u32[144,128]{1,0:T(1,128)}', space=vmem, size = 0x12000, scoped, tag = 'internal scratch']
  %s0 = inlined_call_operand.hbm [shape: f32[2,8,32], index: 0, kind: input, shape index: {}]
  %s1 = inlined_call_operand.hbm [shape: f32[2,8,32], index: 1, kind: input, shape index: {}]
  %s2 = inlined_call_operand.hbm [shape: f32[2,8,32], index: 2, kind: input, shape index: {}]
  %s3 = inlined_call_operand.hbm [shape: f32[32,32], index: 3, kind: input, shape index: {}]
  %s4 = inlined_call_operand.hbm [shape: f32[32,32], index: 4, kind: input, shape index: {}]
  %s5 = inlined_call_operand.hbm [shape: f32[32,32], index: 5, kind: input, shape index: {}]
  %s6 = inlined_call_operand.hbm [shape: f32[32,32], index: 6, kind: input, shape index: {}]
  %s7 = inlined_call_operand.vmem [shape: f32[1,32], index: 7, kind: input, shape index: {}]
  %s8 = inlined_call_operand.vmem [shape: f32[1,32], index: 8, kind: input, shape index: {}]
  %s9 = inlined_call_operand.vmem [shape: f32[1,32], index: 9, kind: input, shape index: {}]
  %s10 = inlined_call_operand.vmem [shape: f32[1,32], index: 10, kind: input, shape index: {}]
  %s11 = inlined_call_operand.vmem [shape: f32[2,8,8], index: 11, kind: input, shape index: {}]
  %s12 = inlined_call_operand.hbm [shape: f32[2,8,32], index: 12, kind: output, shape index: {0}]
  %s13 = inlined_call_operand.hbm [shape: f32[2,8,8], index: 13, kind: output, shape index: {1}]
  %14 = xla_tuple %s12, %s13
  %s15 = sld [smem:[#allocation0]]
  $region117: #{tpu_custom_call.1} parent=0
    _
  %s17 = ssub.s32 1, %s15
  %s18 = scalar_select 0, %s17, %s15
  $region1: #{tpu_custom_call.1} parent=0
    #allocation2 [shape = 'u8[8192]{0}', space=vmem, size = 0x2000, scoped, tag = 'input window, operand 0']
    #allocation3 [shape = 's32[2]{0}', space=sflag, size = 0x8, scoped, tag = 'scoped memory for tpu_custom_call.1']
    #allocation4 [shape = 's32[2]{0}', space=sflag, size = 0x8, scoped, tag = 'scoped memory for tpu_custom_call.1']
    #allocation5 [shape = 'u8[8192]{0}', space=vmem, size = 0x2000, scoped, tag = 'input window, operand 1']
    #allocation6 [shape = 's32[2]{0}', space=sflag, size = 0x8, scoped, tag = 'scoped memory for tpu_custom_call.1']
    #allocation7 [shape = 'u8[8192]{0}', space=vmem, size = 0x2000, scoped, tag = 'input window, operand 2']
    #allocation8 [shape = 'u8[16384]{0}', space=vmem, size = 0x4000, scoped, tag = 'input window, operand 3, single buffered']
    #allocation9 [shape = 's32[1]{0}', space=sflag, size = 0x4, scoped, tag = 'scoped memory for tpu_custom_call.1']
    #allocation10 [shape = 'u8[16384]{0}', space=vmem, size = 0x4000, scoped, tag = 'input window, operand 4, single buffered']
    #allocation11 [shape = 'u8[16384]{0}', space=vmem, size = 0x4000, scoped, tag = 'input window, operand 5, single buffered']
    #allocation12 [shape = 's32[1]{0}', space=sflag, size = 0x4, scoped, tag = 'scoped memory for tpu_custom_call.1']
    #allocation13 [shape = 'u8[16384]{0}', space=vmem, size = 0x4000, scoped, tag = 'input window, operand 6, single buffered']
    #allocation14 [shape = 'u8[8192]{0}', space=vmem, size = 0x2000, scoped, tag = 'output window, operand 0']
    #allocation15 [shape = 'u8[8192]{0}', space=vmem, size = 0x2000, scoped, tag = 'output window, operand 1']
    #allocation16 [shape = 's32[2]{0}', space=sflag, size = 0x8, scoped, tag = 'scoped memory for tpu_custom_call.1']
    %19 = vsyncpa [#allocation3], 0
    %s20 = scalar_lea.sflag [#allocation3], 1
    %21 = vsyncpa %s20, 0
    %22 = vsyncpa [#allocation6], 0
    %s23 = scalar_lea.sflag [#allocation6], 1
    %24 = vsyncpa %s23, 0
    %25 = vsyncpa [#allocation9], 0
    %26 = vsyncpa [#allocation12], 0
    %27 = vsyncpa [#allocation4], 0
    %s28 = scalar_lea.sflag [#allocation4], 1
    %29 = vsyncpa %s28, 0
    %30 = vsyncpa [#allocation16], 0
    %s31 = scalar_lea.sflag [#allocation16], 1
    %32 = vsyncpa %s31, 0
    loop: start=0, step=1, limit=4
    $region2: #{tpu_custom_call.1} parent=1 // loop_pre_header
      _
    $region3: #{tpu_custom_call.1} parent=1 // loop_header
      %s34 = sphi 0, %s38
      %p35 = scmp.ge.s32.totalorder %s34, 4
      %s44 = sphi 0, %s46
      %s47 = sphi 0, %s44
      %s48 = sphi 0, %s47
      %s64 = sphi 0, %s48
      %s70 = sphi 0, %s72
      %s73 = sphi 0, %s70
      %s74 = sphi 0, %s73
      %s90 = sphi 0, %s74
      %s96 = sphi 0, %s98
      %s99 = sphi 0, %s96
      %s100 = sphi 0, %s99
      %s116 = sphi 0, %s100
      %s120 = sphi 0, %s120
      %s122 = sphi 0, %s120
      %s123 = sphi 0, %s122
      %s137 = sphi 0, %s123
      %s141 = sphi 0, %s141
      %s143 = sphi 0, %s141
      %s144 = sphi 0, %s143
      %s158 = sphi 0, %s144
      %s162 = sphi 0, %s162
      %s164 = sphi 0, %s162
      %s165 = sphi 0, %s164
      %s179 = sphi 0, %s165
      %s183 = sphi 0, %s183
      %s185 = sphi 0, %s183
      %s186 = sphi 0, %s185
      %s200 = sphi 0, %s186
      %s204 = sphi 0, %s204
      %s206 = sphi 0, %s204
      %s207 = sphi 0, %s206
      %s221 = sphi 0, %s207
      %s225 = sphi 0, %s225
      %s227 = sphi 0, %s225
      %s228 = sphi 0, %s227
      %s242 = sphi 0, %s228
      %s246 = sphi 0, %s246
      %s248 = sphi 0, %s246
      %s249 = sphi 0, %s248
      %s263 = sphi 0, %s249
      %s267 = sphi 0, %s267
      %s269 = sphi 0, %s267
      %s270 = sphi 0, %s269
      %s284 = sphi 0, %s270
      %s290 = sphi 0, %s292
      %s293 = sphi 0, %s290
      %s294 = sphi 0, %s293
      %s310 = sphi 0, %s294
      %s316 = sphi 0, %s318
      %s319 = sphi 0, %s316
      %s320 = sphi 0, %s319
      %s336 = sphi 0, %s320
      %s342 = sphi 0, %s344
      %s345 = sphi 0, %s342
      %s346 = sphi 0, %s345
      %s362 = sphi 0, %s346
    $region4: #{tpu_custom_call.1} parent=1 // loop_header_branch
      %37 = sbr.rel (%p35) target = $region8
    $region5: #{tpu_custom_call.1} parent=1 // loop_body
      %s39 = ssub.s32 %s34, 1
      %s40 = ssub.s32 %s34, 2
      %s41 = sadd.s32 %s34, 1
      %s42 = ssub.s32 %s34, %s41
      %p43 = scmp.eq.s32.totalorder %s42, 0
      %s45 = sadd.s32 %s44, 1
      %s46 = scalar_select %p43, %s44, %s45
      %p49 = pneg %p43
      %p50 = scmp.eq.s32.totalorder %s34, 1
      %p51 = por %p49, %p50
      %p52 = scmp.ne.s32.totalorder %s44, %s47
      %p53 = scmp.eq.s32.totalorder %s34, 0
      %p54 = por %p52, %p53
      %p55 = scmp.ne.s32.totalorder %s44, %s47
      %p56 = scmp.eq.s32.totalorder %s39, 1
      %p57 = por %p55, %p56
      %p58 = scmp.ne.s32.totalorder %s47, %s48
      %p59 = scmp.eq.s32.totalorder %s39, 0
      %p60 = por %p58, %p59
      %p61 = scmp.ne.s32.totalorder %s47, %s48
      %p62 = scmp.eq.s32.totalorder %s40, 1
      %p63 = por %p61, %p62
      %p65 = scmp.ne.s32.totalorder %s48, %s64
      %p66 = scmp.eq.s32.totalorder %s40, 0
      %p67 = por %p65, %p66
      %s68 = ssub.s32 %s34, %s41
      %p69 = scmp.eq.s32.totalorder %s68, 0
      %s71 = sadd.s32 %s70, 1
      %s72 = scalar_select %p69, %s70, %s71
      %p75 = pneg %p69
      %p76 = scmp.eq.s32.totalorder %s34, 1
      %p77 = por %p75, %p76
      %p78 = scmp.ne.s32.totalorder %s70, %s73
      %p79 = scmp.eq.s32.totalorder %s34, 0
      %p80 = por %p78, %p79
      %p81 = scmp.ne.s32.totalorder %s70, %s73
      %p82 = scmp.eq.s32.totalorder %s39, 1
      %p83 = por %p81, %p82
      %p84 = scmp.ne.s32.totalorder %s73, %s74
      %p85 = scmp.eq.s32.totalorder %s39, 0
      %p86 = por %p84, %p85
      %p87 = scmp.ne.s32.totalorder %s73, %s74
      %p88 = scmp.eq.s32.totalorder %s40, 1
      %p89 = por %p87, %p88
      %p91 = scmp.ne.s32.totalorder %s74, %s90
      %p92 = scmp.eq.s32.totalorder %s40, 0
      %p93 = por %p91, %p92
      %s94 = ssub.s32 %s34, %s41
      %p95 = scmp.eq.s32.totalorder %s94, 0
      %s97 = sadd.s32 %s96, 1
      %s98 = scalar_select %p95, %s96, %s97
      %p101 = pneg %p95
      %p102 = scmp.eq.s32.totalorder %s34, 1
      %p103 = por %p101, %p102
      %p104 = scmp.ne.s32.totalorder %s96, %s99
      %p105 = scmp.eq.s32.totalorder %s34, 0
      %p106 = por %p104, %p105
      %p107 = scmp.ne.s32.totalorder %s96, %s99
      %p108 = scmp.eq.s32.totalorder %s39, 1
      %p109 = por %p107, %p108
      %p110 = scmp.ne.s32.totalorder %s99, %s100
      %p111 = scmp.eq.s32.totalorder %s39, 0
      %p112 = por %p110, %p111
      %p113 = scmp.ne.s32.totalorder %s99, %s100
      %p114 = scmp.eq.s32.totalorder %s40, 1
      %p115 = por %p113, %p114
      %p117 = scmp.ne.s32.totalorder %s100, %s116
      %p118 = scmp.eq.s32.totalorder %s40, 0
      %p119 = por %p117, %p118
      %s121 = sadd.s32 %s120, 1
      %p124 = scmp.eq.s32.totalorder %s34, 1
      %p125 = scmp.ne.s32.totalorder %s120, %s122
      %p126 = scmp.eq.s32.totalorder %s34, 0
      %p127 = por %p125, %p126
      %p128 = scmp.ne.s32.totalorder %s120, %s122
      %p129 = scmp.eq.s32.totalorder %s39, 1
      %p130 = por %p128, %p129
      %p131 = scmp.ne.s32.totalorder %s122, %s123
      %p132 = scmp.eq.s32.totalorder %s39, 0
      %p133 = por %p131, %p132
      %p134 = scmp.ne.s32.totalorder %s122, %s123
      %p135 = scmp.eq.s32.totalorder %s40, 1
      %p136 = por %p134, %p135
      %p138 = scmp.ne.s32.totalorder %s123, %s137
      %p139 = scmp.eq.s32.totalorder %s40, 0
      %p140 = por %p138, %p139
      %s142 = sadd.s32 %s141, 1
      %p145 = scmp.eq.s32.totalorder %s34, 1
      %p146 = scmp.ne.s32.totalorder %s141, %s143
      %p147 = scmp.eq.s32.totalorder %s34, 0
      %p148 = por %p146, %p147
      %p149 = scmp.ne.s32.totalorder %s141, %s143
      %p150 = scmp.eq.s32.totalorder %s39, 1
      %p151 = por %p149, %p150
      %p152 = scmp.ne.s32.totalorder %s143, %s144
      %p153 = scmp.eq.s32.totalorder %s39, 0
      %p154 = por %p152, %p153
      %p155 = scmp.ne.s32.totalorder %s143, %s144
      %p156 = scmp.eq.s32.totalorder %s40, 1
      %p157 = por %p155, %p156
      %p159 = scmp.ne.s32.totalorder %s144, %s158
      %p160 = scmp.eq.s32.totalorder %s40, 0
      %p161 = por %p159, %p160
      %s163 = sadd.s32 %s162, 1
      %p166 = scmp.eq.s32.totalorder %s34, 1
      %p167 = scmp.ne.s32.totalorder %s162, %s164
      %p168 = scmp.eq.s32.totalorder %s34, 0
      %p169 = por %p167, %p168
      %p170 = scmp.ne.s32.totalorder %s162, %s164
      %p171 = scmp.eq.s32.totalorder %s39, 1
      %p172 = por %p170, %p171
      %p173 = scmp.ne.s32.totalorder %s164, %s165
      %p174 = scmp.eq.s32.totalorder %s39, 0
      %p175 = por %p173, %p174
      %p176 = scmp.ne.s32.totalorder %s164, %s165
      %p177 = scmp.eq.s32.totalorder %s40, 1
      %p178 = por %p176, %p177
      %p180 = scmp.ne.s32.totalorder %s165, %s179
      %p181 = scmp.eq.s32.totalorder %s40, 0
      %p182 = por %p180, %p181
      %s184 = sadd.s32 %s183, 1
      %p187 = scmp.eq.s32.totalorder %s34, 1
      %p188 = scmp.ne.s32.totalorder %s183, %s185
      %p189 = scmp.eq.s32.totalorder %s34, 0
      %p190 = por %p188, %p189
      %p191 = scmp.ne.s32.totalorder %s183, %s185
      %p192 = scmp.eq.s32.totalorder %s39, 1
      %p193 = por %p191, %p192
      %p194 = scmp.ne.s32.totalorder %s185, %s186
      %p195 = scmp.eq.s32.totalorder %s39, 0
      %p196 = por %p194, %p195
      %p197 = scmp.ne.s32.totalorder %s185, %s186
      %p198 = scmp.eq.s32.totalorder %s40, 1
      %p199 = por %p197, %p198
      %p201 = scmp.ne.s32.totalorder %s186, %s200
      %p202 = scmp.eq.s32.totalorder %s40, 0
      %p203 = por %p201, %p202
      %s205 = sadd.s32 %s204, 1
      %p208 = scmp.eq.s32.totalorder %s34, 1
      %p209 = scmp.ne.s32.totalorder %s204, %s206
      %p210 = scmp.eq.s32.totalorder %s34, 0
      %p211 = por %p209, %p210
      %p212 = scmp.ne.s32.totalorder %s204, %s206
      %p213 = scmp.eq.s32.totalorder %s39, 1
      %p214 = por %p212, %p213
      %p215 = scmp.ne.s32.totalorder %s206, %s207
      %p216 = scmp.eq.s32.totalorder %s39, 0
      %p217 = por %p215, %p216
      %p218 = scmp.ne.s32.totalorder %s206, %s207
      %p219 = scmp.eq.s32.totalorder %s40, 1
      %p220 = por %p218, %p219
      %p222 = scmp.ne.s32.totalorder %s207, %s221
      %p223 = scmp.eq.s32.totalorder %s40, 0
      %p224 = por %p222, %p223
      %s226 = sadd.s32 %s225, 1
      %p229 = scmp.eq.s32.totalorder %s34, 1
      %p230 = scmp.ne.s32.totalorder %s225, %s227
      %p231 = scmp.eq.s32.totalorder %s34, 0
      %p232 = por %p230, %p231
      %p233 = scmp.ne.s32.totalorder %s225, %s227
      %p234 = scmp.eq.s32.totalorder %s39, 1
      %p235 = por %p233, %p234
      %p236 = scmp.ne.s32.totalorder %s227, %s228
      %p237 = scmp.eq.s32.totalorder %s39, 0
      %p238 = por %p236, %p237
      %p239 = scmp.ne.s32.totalorder %s227, %s228
      %p240 = scmp.eq.s32.totalorder %s40, 1
      %p241 = por %p239, %p240
      %p243 = scmp.ne.s32.totalorder %s228, %s242
      %p244 = scmp.eq.s32.totalorder %s40, 0
      %p245 = por %p243, %p244
      %s247 = sadd.s32 %s246, 1
      %p250 = scmp.eq.s32.totalorder %s34, 1
      %p251 = scmp.ne.s32.totalorder %s246, %s248
      %p252 = scmp.eq.s32.totalorder %s34, 0
      %p253 = por %p251, %p252
      %p254 = scmp.ne.s32.totalorder %s246, %s248
      %p255 = scmp.eq.s32.totalorder %s39, 1
      %p256 = por %p254, %p255
      %p257 = scmp.ne.s32.totalorder %s248, %s249
      %p258 = scmp.eq.s32.totalorder %s39, 0
      %p259 = por %p257, %p258
      %p260 = scmp.ne.s32.totalorder %s248, %s249
      %p261 = scmp.eq.s32.totalorder %s40, 1
      %p262 = por %p260, %p261
      %p264 = scmp.ne.s32.totalorder %s249, %s263
      %p265 = scmp.eq.s32.totalorder %s40, 0
      %p266 = por %p264, %p265
      %s268 = sadd.s32 %s267, 1
      %p271 = scmp.eq.s32.totalorder %s34, 1
      %p272 = scmp.ne.s32.totalorder %s267, %s269
      %p273 = scmp.eq.s32.totalorder %s34, 0
      %p274 = por %p272, %p273
      %p275 = scmp.ne.s32.totalorder %s267, %s269
      %p276 = scmp.eq.s32.totalorder %s39, 1
      %p277 = por %p275, %p276
      %p278 = scmp.ne.s32.totalorder %s269, %s270
      %p279 = scmp.eq.s32.totalorder %s39, 0
      %p280 = por %p278, %p279
      %p281 = scmp.ne.s32.totalorder %s269, %s270
      %p282 = scmp.eq.s32.totalorder %s40, 1
      %p283 = por %p281, %p282
      %p285 = scmp.ne.s32.totalorder %s270, %s284
      %p286 = scmp.eq.s32.totalorder %s40, 0
      %p287 = por %p285, %p286
      %s288 = ssub.s32 %s34, %s41
      %p289 = scmp.eq.s32.totalorder %s288, 0
      %s291 = sadd.s32 %s290, 1
      %s292 = scalar_select %p289, %s290, %s291
      %p295 = pneg %p289
      %p296 = scmp.eq.s32.totalorder %s34, 1
      %p297 = por %p295, %p296
      %p298 = scmp.ne.s32.totalorder %s290, %s293
      %p299 = scmp.eq.s32.totalorder %s34, 0
      %p300 = por %p298, %p299
      %p301 = scmp.ne.s32.totalorder %s290, %s293
      %p302 = scmp.eq.s32.totalorder %s39, 1
      %p303 = por %p301, %p302
      %p304 = scmp.ne.s32.totalorder %s293, %s294
      %p305 = scmp.eq.s32.totalorder %s39, 0
      %p306 = por %p304, %p305
      %p307 = scmp.ne.s32.totalorder %s293, %s294
      %p308 = scmp.eq.s32.totalorder %s40, 1
      %p309 = por %p307, %p308
      %p311 = scmp.ne.s32.totalorder %s294, %s310
      %p312 = scmp.eq.s32.totalorder %s40, 0
      %p313 = por %p311, %p312
      %s314 = ssub.s32 %s34, %s41
      %p315 = scmp.eq.s32.totalorder %s314, 0
      %s317 = sadd.s32 %s316, 1
      %s318 = scalar_select %p315, %s316, %s317
      %p321 = pneg %p315
      %p322 = scmp.eq.s32.totalorder %s34, 1
      %p323 = por %p321, %p322
      %p324 = scmp.ne.s32.totalorder %s316, %s319
      %p325 = scmp.eq.s32.totalorder %s34, 0
      %p326 = por %p324, %p325
      %p327 = scmp.ne.s32.totalorder %s316, %s319
      %p328 = scmp.eq.s32.totalorder %s39, 1
      %p329 = por %p327, %p328
      %p330 = scmp.ne.s32.totalorder %s319, %s320
      %p331 = scmp.eq.s32.totalorder %s39, 0
      %p332 = por %p330, %p331
      %p333 = scmp.ne.s32.totalorder %s319, %s320
      %p334 = scmp.eq.s32.totalorder %s40, 1
      %p335 = por %p333, %p334
      %p337 = scmp.ne.s32.totalorder %s320, %s336
      %p338 = scmp.eq.s32.totalorder %s40, 0
      %p339 = por %p337, %p338
      %s340 = ssub.s32 %s34, %s41
      %p341 = scmp.eq.s32.totalorder %s340, 0
      %s343 = sadd.s32 %s342, 1
      %s344 = scalar_select %p341, %s342, %s343
      %p347 = pneg %p341
      %p348 = scmp.eq.s32.totalorder %s34, 1
      %p349 = por %p347, %p348
      %p350 = scmp.ne.s32.totalorder %s342, %s345
      %p351 = scmp.eq.s32.totalorder %s34, 0
      %p352 = por %p350, %p351
      %p353 = scmp.ne.s32.totalorder %s342, %s345
      %p354 = scmp.eq.s32.totalorder %s39, 1
      %p355 = por %p353, %p354
      %p356 = scmp.ne.s32.totalorder %s345, %s346
      %p357 = scmp.eq.s32.totalorder %s39, 0
      %p358 = por %p356, %p357
      %p359 = scmp.ne.s32.totalorder %s345, %s346
      %p360 = scmp.eq.s32.totalorder %s40, 1
      %p361 = por %p359, %p360
      %p363 = scmp.ne.s32.totalorder %s346, %s362
      %p364 = scmp.eq.s32.totalorder %s40, 0
      %p365 = por %p363, %p364
      %p366 = scmp.le.s32.totalorder 1, %s34
      %p367 = scmp.lt.s32.totalorder %s34, 3
      %p368 = pnand %p366, %p367
      %p369 = pneg %p368
      // Predicated region
      $region9: #{tpu_custom_call.1} parent=5 // pred_check
        _
      $region10: #{tpu_custom_call.1} parent=5 // pred_check_branch
        %371 = sbr.rel (%p368) target = $region12
      $region11: #{tpu_custom_call.1} parent=5 // pred_region
        %s372 = ssub.s32 %s34, 1
        // Predicated region
        $region13: #{tpu_custom_call.1} parent=11 // pred_check
          %p373 = pneg %p133
        $region14: #{tpu_custom_call.1} parent=11 // pred_check_branch
          %375 = sbr.rel (%p373) target = $region16
        $region15: #{tpu_custom_call.1} parent=11 // pred_region
          %s377 = ssub.s32 512, 512
          %378 = vsyncadd [#allocation9], %s377
          %s379 = sshll.u32 [#allocation8], 4
          %s380 = int_to_ptr.vmem [resolvable:$true] %s379
          %385 = dma.hbm_to_vmem [thread:$0]  %s3, 512, %s380, [#allocation9], 128, 128, 8
        $region16: #{tpu_custom_call.1} parent=11 // pred_fallthru
          _
        // Predicated region
        $region17: #{tpu_custom_call.1} parent=11 // pred_check
          %p386 = pneg %p154
        $region18: #{tpu_custom_call.1} parent=11 // pred_check_branch
          %388 = sbr.rel (%p386) target = $region20
        $region19: #{tpu_custom_call.1} parent=11 // pred_region
          %s390 = ssub.s32 512, 512
          %391 = vsyncadd [#allocation9], %s390
          %s392 = sshll.u32 [#allocation10], 4
          %s393 = int_to_ptr.vmem [resolvable:$true] %s392
          %398 = dma.hbm_to_vmem [thread:$0]  %s4, 512, %s393, [#allocation9], 128, 128, 8
        $region20: #{tpu_custom_call.1} parent=11 // pred_fallthru
          _
        // Predicated region
        $region21: #{tpu_custom_call.1} parent=11 // pred_check
          %p399 = pneg %p175
        $region22: #{tpu_custom_call.1} parent=11 // pred_check_branch
          %401 = sbr.rel (%p399) target = $region24
        $region23: #{tpu_custom_call.1} parent=11 // pred_region
          %s403 = ssub.s32 512, 512
          %404 = vsyncadd [#allocation12], %s403
          %s405 = sshll.u32 [#allocation11], 4
          %s406 = int_to_ptr.vmem [resolvable:$true] %s405
          %411 = dma.hbm_to_vmem [thread:$0]  %s5, 512, %s406, [#allocation12], 128, 128, 8
        $region24: #{tpu_custom_call.1} parent=11 // pred_fallthru
          _
        // Predicated region
        $region25: #{tpu_custom_call.1} parent=11 // pred_check
          %p412 = pneg %p196
        $region26: #{tpu_custom_call.1} parent=11 // pred_check_branch
          %414 = sbr.rel (%p412) target = $region28
        $region27: #{tpu_custom_call.1} parent=11 // pred_region
          %s416 = ssub.s32 512, 512
          %417 = vsyncadd [#allocation12], %s416
          %s418 = sshll.u32 [#allocation13], 4
          %s419 = int_to_ptr.vmem [resolvable:$true] %s418
          %424 = dma.hbm_to_vmem [thread:$0]  %s6, 512, %s419, [#allocation12], 128, 128, 8
        $region28: #{tpu_custom_call.1} parent=11 // pred_fallthru
          _
        // Predicated region
        $region29: #{tpu_custom_call.1} parent=11 // pred_check
          %p425 = pneg %p217
        $region30: #{tpu_custom_call.1} parent=11 // pred_check_branch
          %427 = sbr.rel (%p425) target = $region32
        $region31: #{tpu_custom_call.1} parent=11 // pred_region
          _
        $region32: #{tpu_custom_call.1} parent=11 // pred_fallthru
          _
        // Predicated region
        $region33: #{tpu_custom_call.1} parent=11 // pred_check
          %p428 = pneg %p238
        $region34: #{tpu_custom_call.1} parent=11 // pred_check_branch
          %430 = sbr.rel (%p428) target = $region36
        $region35: #{tpu_custom_call.1} parent=11 // pred_region
          _
        $region36: #{tpu_custom_call.1} parent=11 // pred_fallthru
          _
        // Predicated region
        $region37: #{tpu_custom_call.1} parent=11 // pred_check
          %p431 = pneg %p259
        $region38: #{tpu_custom_call.1} parent=11 // pred_check_branch
          %433 = sbr.rel (%p431) target = $region40
        $region39: #{tpu_custom_call.1} parent=11 // pred_region
          _
        $region40: #{tpu_custom_call.1} parent=11 // pred_fallthru
          _
        // Predicated region
        $region41: #{tpu_custom_call.1} parent=11 // pred_check
          %p434 = pneg %p280
        $region42: #{tpu_custom_call.1} parent=11 // pred_check_branch
          %436 = sbr.rel (%p434) target = $region44
        $region43: #{tpu_custom_call.1} parent=11 // pred_region
          _
        $region44: #{tpu_custom_call.1} parent=11 // pred_fallthru
          _
      $region12: #{tpu_custom_call.1} parent=5 // pred_fallthru
        _
      %p437 = scmp.lt.s32.totalorder %s34, 2
      // Predicated region
      $region45: #{tpu_custom_call.1} parent=5 // pred_check
        %p438 = pneg %p437
      $region46: #{tpu_custom_call.1} parent=5 // pred_check_branch
        %440 = sbr.rel (%p438) target = $region48
      $region47: #{tpu_custom_call.1} parent=5 // pred_region
        // Predicated region
        $region49: #{tpu_custom_call.1} parent=47 // pred_check
          %p441 = pneg %p54
        $region50: #{tpu_custom_call.1} parent=47 // pred_check_branch
          %443 = sbr.rel (%p441) target = $region52
        $region51: #{tpu_custom_call.1} parent=47 // pred_region
          %s444 = sand.u32 %s44, 1
          %s445 = scalar_lea.sflag [#allocation3], %s444
          %s446 = sand.u32 %s44, 1
          %s447 = smul.addr %s446, 8
          %s448 = scalar_lea.vmem [#allocation2], %s447
          %s450 = ssub.s32 128, 128
          %451 = vsyncadd %s445, %s450
          %s452 = smul.addr %s34, 128
          %s453 = scalar_lea.hbm %s0, %s452
          %s455 = sshll.u32 %s448, 4
          %s456 = int_to_ptr.vmem [resolvable:$true] %s455
          %458 = dma.hbm_to_vmem [thread:$0]  %s453, 128, %s456, %s445
        $region52: #{tpu_custom_call.1} parent=47 // pred_fallthru
          _
        // Predicated region
        $region53: #{tpu_custom_call.1} parent=47 // pred_check
          %p459 = pneg %p80
        $region54: #{tpu_custom_call.1} parent=47 // pred_check_branch
          %461 = sbr.rel (%p459) target = $region56
        $region55: #{tpu_custom_call.1} parent=47 // pred_region
          %s462 = sand.u32 %s34, 1
          %s463 = scalar_lea.sflag [#allocation6], %s462
          %s464 = sand.u32 %s70, 1
          %s465 = smul.addr %s464, 8
          %s466 = scalar_lea.vmem [#allocation5], %s465
          %s468 = ssub.s32 128, 128
          %469 = vsyncadd %s463, %s468
          %s470 = smul.addr %s34, 128
          %s471 = scalar_lea.hbm %s1, %s470
          %s473 = sshll.u32 %s466, 4
          %s474 = int_to_ptr.vmem [resolvable:$true] %s473
          %476 = dma.hbm_to_vmem [thread:$0]  %s471, 128, %s474, %s463
        $region56: #{tpu_custom_call.1} parent=47 // pred_fallthru
          _
        // Predicated region
        $region57: #{tpu_custom_call.1} parent=47 // pred_check
          %p477 = pneg %p106
        $region58: #{tpu_custom_call.1} parent=47 // pred_check_branch
          %479 = sbr.rel (%p477) target = $region60
        $region59: #{tpu_custom_call.1} parent=47 // pred_region
          %s480 = sand.u32 %s34, 1
          %s481 = scalar_lea.sflag [#allocation6], %s480
          %s482 = sand.u32 %s96, 1
          %s483 = smul.addr %s482, 8
          %s484 = scalar_lea.vmem [#allocation7], %s483
          %s486 = ssub.s32 128, 128
          %487 = vsyncadd %s481, %s486
          %s488 = smul.addr %s34, 128
          %s489 = scalar_lea.hbm %s2, %s488
          %s491 = sshll.u32 %s484, 4
          %s492 = int_to_ptr.vmem [resolvable:$true] %s491
          %494 = dma.hbm_to_vmem [thread:$0]  %s489, 128, %s492, %s481
        $region60: #{tpu_custom_call.1} parent=47 // pred_fallthru
          _
        // Predicated region
        $region61: #{tpu_custom_call.1} parent=47 // pred_check
          %p495 = pneg %p300
        $region62: #{tpu_custom_call.1} parent=47 // pred_check_branch
          %497 = sbr.rel (%p495) target = $region64
        $region63: #{tpu_custom_call.1} parent=47 // pred_region
          %p498 = scmp.lt.s32.totalorder %s34, 1
          %s499 = scalar_select %p498, %s34, 1
          %s500 = smul.addr %s499, 8
          %s501 = scalar_lea.vmem %s11, %s500
        $region64: #{tpu_custom_call.1} parent=47 // pred_fallthru
          _
      $region48: #{tpu_custom_call.1} parent=5 // pred_fallthru
        _
      %p502 = scmp.le.s32.totalorder 1, %s34
      %p503 = scmp.lt.s32.totalorder %s34, 3
      %p504 = pnand %p502, %p503
      %p505 = pneg %p504
      // Predicated region
      $region65: #{tpu_custom_call.1} parent=5 // pred_check
        _
      $region66: #{tpu_custom_call.1} parent=5 // pred_check_branch
        %507 = sbr.rel (%p504) target = $region68
      $region67: #{tpu_custom_call.1} parent=5 // pred_region
        %s508 = ssub.s32 %s34, 1
        %s509 = sand.u32 %s47, 1
        %s510 = scalar_lea.sflag [#allocation3], %s509
        %s511 = sand.u32 %s47, 1
        %s512 = smul.addr %s511, 8
        %s513 = scalar_lea.vmem [#allocation2], %s512
        // Predicated region
        $region69: #{tpu_custom_call.1} parent=67 // pred_check
          %p514 = pneg %p60
        $region70: #{tpu_custom_call.1} parent=67 // pred_check_branch
          %516 = sbr.rel (%p514) target = $region72
        $region71: #{tpu_custom_call.1} parent=67 // pred_region
          %517 = dma.done %s510, 128
        $region72: #{tpu_custom_call.1} parent=67 // pred_fallthru
          _
        %s518 = sand.u32 %s39, 1
        %s519 = scalar_lea.sflag [#allocation6], %s518
        %s520 = sand.u32 %s73, 1
        %s521 = smul.addr %s520, 8
        %s522 = scalar_lea.vmem [#allocation5], %s521
        // Predicated region
        $region73: #{tpu_custom_call.1} parent=67 // pred_check
          %p523 = pneg %p86
        $region74: #{tpu_custom_call.1} parent=67 // pred_check_branch
          %525 = sbr.rel (%p523) target = $region76
        $region75: #{tpu_custom_call.1} parent=67 // pred_region
          %526 = dma.done %s519, 128
        $region76: #{tpu_custom_call.1} parent=67 // pred_fallthru
          _
        %s527 = sand.u32 %s39, 1
        %s528 = scalar_lea.sflag [#allocation6], %s527
        %s529 = sand.u32 %s99, 1
        %s530 = smul.addr %s529, 8
        %s531 = scalar_lea.vmem [#allocation7], %s530
        // Predicated region
        $region77: #{tpu_custom_call.1} parent=67 // pred_check
          %p532 = pneg %p112
        $region78: #{tpu_custom_call.1} parent=67 // pred_check_branch
          %534 = sbr.rel (%p532) target = $region80
        $region79: #{tpu_custom_call.1} parent=67 // pred_region
          %535 = dma.done %s528, 128
        $region80: #{tpu_custom_call.1} parent=67 // pred_fallthru
          _
        // Predicated region
        $region81: #{tpu_custom_call.1} parent=67 // pred_check
          %p536 = pneg %p133
        $region82: #{tpu_custom_call.1} parent=67 // pred_check_branch
          %538 = sbr.rel (%p536) target = $region84
        $region83: #{tpu_custom_call.1} parent=67 // pred_region
          %539 = dma.done [#allocation9], 512
        $region84: #{tpu_custom_call.1} parent=67 // pred_fallthru
          _
        // Predicated region
        $region85: #{tpu_custom_call.1} parent=67 // pred_check
          %p540 = pneg %p154
        $region86: #{tpu_custom_call.1} parent=67 // pred_check_branch
          %542 = sbr.rel (%p540) target = $region88
        $region87: #{tpu_custom_call.1} parent=67 // pred_region
          %543 = dma.done [#allocation9], 512
        $region88: #{tpu_custom_call.1} parent=67 // pred_fallthru
          _
        // Predicated region
        $region89: #{tpu_custom_call.1} parent=67 // pred_check
          %p544 = pneg %p175
        $region90: #{tpu_custom_call.1} parent=67 // pred_check_branch
          %546 = sbr.rel (%p544) target = $region92
        $region91: #{tpu_custom_call.1} parent=67 // pred_region
          %547 = dma.done [#allocation12], 512
        $region92: #{tpu_custom_call.1} parent=67 // pred_fallthru
          _
        // Predicated region
        $region93: #{tpu_custom_call.1} parent=67 // pred_check
          %p548 = pneg %p196
        $region94: #{tpu_custom_call.1} parent=67 // pred_check_branch
          %550 = sbr.rel (%p548) target = $region96
        $region95: #{tpu_custom_call.1} parent=67 // pred_region
          %551 = dma.done [#allocation12], 512
        $region96: #{tpu_custom_call.1} parent=67 // pred_fallthru
          _
        %s552 = sand.u32 %s47, 1
        %s553 = scalar_lea.sflag [#allocation3], %s552
        %s554 = sand.u32 %s47, 1
        %s555 = smul.addr %s554, 8
        %s556 = scalar_lea.vmem [#allocation2], %s555
        %p557 = pneg %p60
        %p558 = pneg %p57
        %s559 = sand.u32 %s39, 1
        %s560 = scalar_lea.sflag [#allocation6], %s559
        %s561 = sand.u32 %s73, 1
        %s562 = smul.addr %s561, 8
        %s563 = scalar_lea.vmem [#allocation5], %s562
        %p564 = pneg %p86
        %p565 = pneg %p83
        %s566 = sand.u32 %s39, 1
        %s567 = scalar_lea.sflag [#allocation6], %s566
        %s568 = sand.u32 %s99, 1
        %s569 = smul.addr %s568, 8
        %s570 = scalar_lea.vmem [#allocation7], %s569
        %p571 = pneg %p112
        %p572 = pneg %p109
        %p573 = pneg %p133
        %p574 = pneg %p130
        %p575 = pneg %p154
        %p576 = pneg %p151
        %p577 = pneg %p175
        %p578 = pneg %p172
        %p579 = pneg %p196
        %p580 = pneg %p193
        %p581 = pneg %p217
        %p582 = pneg %p214
        %p583 = pneg %p238
        %p584 = pneg %p235
        %p585 = pneg %p259
        %p586 = pneg %p256
        %p587 = pneg %p280
        %p588 = pneg %p277
        %p589 = scmp.lt.s32.totalorder %s39, 1
        %s590 = scalar_select %p589, %s39, 1
        %s591 = smul.addr %s590, 8
        %s592 = scalar_lea.vmem %s11, %s591
        %p593 = pneg %p306
        %p594 = pneg %p303
        %p595 = pneg %p332
        %p596 = pneg %p329
        %s597 = sand.u32 %s319, 1
        %s598 = scalar_lea.sflag [#allocation4], %s597
        %s599 = sand.u32 %s319, 1
        %s600 = smul.addr %s599, 8
        %s601 = scalar_lea.vmem [#allocation14], %s600
        %p602 = pneg %p358
        %p603 = pneg %p355
        %s604 = sand.u32 %s345, 1
        %s605 = scalar_lea.sflag [#allocation16], %s604
        %s606 = sand.u32 %s345, 1
        %s607 = smul.addr %s606, 8
        %s608 = scalar_lea.vmem [#allocation15], %s607
        %p609 = scmp.lt.s32.totalorder %s39, 1
        %s610 = scalar_select %p609, %s39, 1
        %s611 = smul.addr %s610, 8
        %s612 = scalar_lea.vmem %s11, %s611
        %v613 = vld [vmem:[%s513] sm:$0xff]
        %v614 = vld [vmem:[%s522] sm:$0xff]
        %v615 = vld [vmem:[%s531] sm:$0xff]
        %v616 = vld [vmem:[#allocation8] sm:$0xff]
        %v617 = vld [vmem:[#allocation8 + $0x8] sm:$0xff]
        %v618 = vld [vmem:[#allocation8 + $0x10] sm:$0xff]
        %v619 = vld [vmem:[#allocation8 + $0x18] sm:$0xff]
        %v620 = vld [vmem:[%s7] sm:$0x1]
        %v622 = vlaneseq
        %v623 = vshrl.u32 %v622, 7
        %v624 = vsub.s32 0, %v623
        %v625 = vrot.slane %v620, %v624
        %vm627 = vcmask 261120
        %v629 = vsel %vm627, %v613, 0
        %631 = vmatprep.subr.mxu0 0.0
        %632 = vmatpush1.msra.mxu0 %v616
        %633 = vmatprep.subr.mxu0 0.0
        %634 = vmatpush1.msra.mxu0 %v617
        %635 = vmatprep.subr.mxu0 0.0
        %636 = vmatpush1.msra.mxu0 %v618
        %637 = vmatprep.subr.mxu0 0.0
        %638 = vmatpush1.msra.mxu0 %v619
        %639 = vmatprep.subr.mxu0 0.0
        %640 = vmatpush1.msra.mxu0 0.0
        %641 = vmatprep.subr.mxu0 0.0
        %642 = vmatpush1.msra.mxu0 0.0
        %643 = vmatprep.subr.mxu0 0.0
        %644 = vmatpush1.msra.mxu0 0.0
        %645 = vmatprep.subr.mxu0 0.0
        %646 = vmatpush1.msra.mxu0 0.0
        %647 = vmatprep.subr.mxu0 0.0
        %648 = vmatpush1.msra.mxu0 0.0
        %649 = vmatprep.subr.mxu0 0.0
        %650 = vmatpush1.msra.mxu0 0.0
        %651 = vmatprep.subr.mxu0 0.0
        %652 = vmatpush1.msra.mxu0 0.0
        %653 = vmatprep.subr.mxu0 0.0
        %654 = vmatpush1.msra.mxu0 0.0
        %655 = vmatprep.subr.mxu0 0.0
        %656 = vmatpush1.msra.mxu0 0.0
        %657 = vmatprep.subr.mxu0 0.0
        %658 = vmatpush1.msra.mxu0 0.0
        %659 = vmatprep.subr.mxu0 0.0
        %660 = vmatpush1.msra.mxu0 0.0
        %661 = vmatprep.subr.mxu0 0.0
        %662 = vmatpush1.msra.mxu0 0.0
        %663 = vmatprep.subr.mxu0 0.0
        %664 = vmatpush1.msra.mxu0 0.0
        %665 = vmatprep.subr.mxu0 0.0
        %666 = vmatpush1.msra.mxu0 0.0
        %667 = vmatprep.subr.mxu0 0.0
        %668 = vmatpush1.msra.mxu0 0.0
        %669 = vmatprep.subr.mxu0 0.0
        %670 = vmatpush1.msra.mxu0 0.0
        %671 = vmatprep.subr.mxu0 0.0
        %672 = vmatpush1.msra.mxu0 0.0
        %673 = vmatprep.subr.mxu0 0.0
        %674 = vmatpush1.msra.mxu0 0.0
        %675 = vmatprep.subr.mxu0 0.0
        %676 = vmatpush1.msra.mxu0 0.0
        %677 = vmatprep.subr.mxu0 0.0
        %678 = vmatpush1.msra.mxu0 0.0
        %679 = vmatprep.subr.mxu0 0.0
        %680 = vmatpush1.msra.mxu0 0.0
        %681 = vmatprep.subr.mxu0 0.0
        %682 = vmatpush1.msra.mxu0 0.0
        %683 = vmatprep.subr.mxu0 0.0
        %684 = vmatpush1.msra.mxu0 0.0
        %685 = vmatprep.subr.mxu0 0.0
        %686 = vmatpush1.msra.mxu0 0.0
        %687 = vmatprep.subr.mxu0 0.0
        %688 = vmatpush1.msra.mxu0 0.0
        %689 = vmatprep.subr.mxu0 0.0
        %690 = vmatpush1.msra.mxu0 0.0
        %691 = vmatprep.subr.mxu0 0.0
        %692 = vmatpush1.msra.mxu0 0.0
        %693 = vmatprep.subr.mxu0 0.0
        %694 = vmatpush1.msra.mxu0 0.0
        %695 = vmatprep.mubr.f32.mxu0 0.0
        %696 = vmatmul.mubr.f32.gmra.mrb[0].mxu0 %v629
        %v697 = vpop.f32.mrb[0].mxu0
        %v698 = vadd.f32 %v625, %v697
        %v699 = vpop.f32.mrb[0].mxu0
        %700 = vdwg.mxu0
        %v701 = vld [vmem:[#allocation10] sm:$0xff]
        %v702 = vld [vmem:[#allocation10 + $0x8] sm:$0xff]
        %v703 = vld [vmem:[#allocation10 + $0x10] sm:$0xff]
        %v704 = vld [vmem:[#allocation10 + $0x18] sm:$0xff]
        %v705 = vld [vmem:[%s8] sm:$0x1]
        %v707 = vlaneseq
        %v708 = vshrl.u32 %v707, 7
        %v709 = vsub.s32 0, %v708
        %v710 = vrot.slane %v705, %v709
        %v713 = vsel %vm627, %v614, 0
        %715 = vmatprep.subr.mxu0 0.0
        %716 = vmatpush1.msra.mxu0 %v701
        %717 = vmatprep.subr.mxu0 0.0
        %718 = vmatpush1.msra.mxu0 %v702
        %719 = vmatprep.subr.mxu0 0.0
        %720 = vmatpush1.msra.mxu0 %v703
        %721 = vmatprep.subr.mxu0 0.0
        %722 = vmatpush1.msra.mxu0 %v704
        %723 = vmatprep.subr.mxu0 0.0
        %724 = vmatpush1.msra.mxu0 0.0
        %725 = vmatprep.subr.mxu0 0.0
        %726 = vmatpush1.msra.mxu0 0.0
        %727 = vmatprep.subr.mxu0 0.0
        %728 = vmatpush1.msra.mxu0 0.0
        %729 = vmatprep.subr.mxu0 0.0
        %730 = vmatpush1.msra.mxu0 0.0
        %731 = vmatprep.subr.mxu0 0.0
        %732 = vmatpush1.msra.mxu0 0.0
        %733 = vmatprep.subr.mxu0 0.0
        %734 = vmatpush1.msra.mxu0 0.0
        %735 = vmatprep.subr.mxu0 0.0
        %736 = vmatpush1.msra.mxu0 0.0
        %737 = vmatprep.subr.mxu0 0.0
        %738 = vmatpush1.msra.mxu0 0.0
        %739 = vmatprep.subr.mxu0 0.0
        %740 = vmatpush1.msra.mxu0 0.0
        %741 = vmatprep.subr.mxu0 0.0
        %742 = vmatpush1.msra.mxu0 0.0
        %743 = vmatprep.subr.mxu0 0.0
        %744 = vmatpush1.msra.mxu0 0.0
        %745 = vmatprep.subr.mxu0 0.0
        %746 = vmatpush1.msra.mxu0 0.0
        %747 = vmatprep.subr.mxu0 0.0
        %748 = vmatpush1.msra.mxu0 0.0
        %749 = vmatprep.subr.mxu0 0.0
        %750 = vmatpush1.msra.mxu0 0.0
        %751 = vmatprep.subr.mxu0 0.0
        %752 = vmatpush1.msra.mxu0 0.0
        %753 = vmatprep.subr.mxu0 0.0
        %754 = vmatpush1.msra.mxu0 0.0
        %755 = vmatprep.subr.mxu0 0.0
        %756 = vmatpush1.msra.mxu0 0.0
        %757 = vmatprep.subr.mxu0 0.0
        %758 = vmatpush1.msra.mxu0 0.0
        %759 = vmatprep.subr.mxu0 0.0
        %760 = vmatpush1.msra.mxu0 0.0
        %761 = vmatprep.subr.mxu0 0.0
        %762 = vmatpush1.msra.mxu0 0.0
        %763 = vmatprep.subr.mxu0 0.0
        %764 = vmatpush1.msra.mxu0 0.0
        %765 = vmatprep.subr.mxu0 0.0
        %766 = vmatpush1.msra.mxu0 0.0
        %767 = vmatprep.subr.mxu0 0.0
        %768 = vmatpush1.msra.mxu0 0.0
        %769 = vmatprep.subr.mxu0 0.0
        %770 = vmatpush1.msra.mxu0 0.0
        %771 = vmatprep.subr.mxu0 0.0
        %772 = vmatpush1.msra.mxu0 0.0
        %773 = vmatprep.subr.mxu0 0.0
        %774 = vmatpush1.msra.mxu0 0.0
        %775 = vmatprep.subr.mxu0 0.0
        %776 = vmatpush1.msra.mxu0 0.0
        %777 = vmatprep.subr.mxu0 0.0
        %778 = vmatpush1.msra.mxu0 0.0
        %779 = vmatprep.mubr.f32.mxu0 0.0
        %780 = vmatmul.mubr.f32.gmra.mrb[0].mxu0 %v713
        %v781 = vpop.f32.mrb[0].mxu0
        %v782 = vadd.f32 %v710, %v781
        %v783 = vpop.f32.mrb[0].mxu0
        %784 = vdwg.mxu0
        %v785 = vld [vmem:[#allocation11] sm:$0xff]
        %v786 = vld [vmem:[#allocation11 + $0x8] sm:$0xff]
        %v787 = vld [vmem:[#allocation11 + $0x10] sm:$0xff]
        %v788 = vld [vmem:[#allocation11 + $0x18] sm:$0xff]
        %v789 = vld [vmem:[%s9] sm:$0x1]
        %v791 = vlaneseq
        %v792 = vshrl.u32 %v791, 7
        %v793 = vsub.s32 0, %v792
        %v794 = vrot.slane %v789, %v793
        %v797 = vsel %vm627, %v615, 0
        %799 = vmatprep.subr.mxu0 0.0
        %800 = vmatpush1.msra.mxu0 %v785
        %801 = vmatprep.subr.mxu0 0.0
        %802 = vmatpush1.msra.mxu0 %v786
        %803 = vmatprep.subr.mxu0 0.0
        %804 = vmatpush1.msra.mxu0 %v787
        %805 = vmatprep.subr.mxu0 0.0
        %806 = vmatpush1.msra.mxu0 %v788
        %807 = vmatprep.subr.mxu0 0.0
        %808 = vmatpush1.msra.mxu0 0.0
        %809 = vmatprep.subr.mxu0 0.0
        %810 = vmatpush1.msra.mxu0 0.0
        %811 = vmatprep.subr.mxu0 0.0
        %812 = vmatpush1.msra.mxu0 0.0
        %813 = vmatprep.subr.mxu0 0.0
        %814 = vmatpush1.msra.mxu0 0.0
        %815 = vmatprep.subr.mxu0 0.0
        %816 = vmatpush1.msra.mxu0 0.0
        %817 = vmatprep.subr.mxu0 0.0
        %818 = vmatpush1.msra.mxu0 0.0
        %819 = vmatprep.subr.mxu0 0.0
        %820 = vmatpush1.msra.mxu0 0.0
        %821 = vmatprep.subr.mxu0 0.0
        %822 = vmatpush1.msra.mxu0 0.0
        %823 = vmatprep.subr.mxu0 0.0
        %824 = vmatpush1.msra.mxu0 0.0
        %825 = vmatprep.subr.mxu0 0.0
        %826 = vmatpush1.msra.mxu0 0.0
        %827 = vmatprep.subr.mxu0 0.0
        %828 = vmatpush1.msra.mxu0 0.0
        %829 = vmatprep.subr.mxu0 0.0
        %830 = vmatpush1.msra.mxu0 0.0
        %831 = vmatprep.subr.mxu0 0.0
        %832 = vmatpush1.msra.mxu0 0.0
        %833 = vmatprep.subr.mxu0 0.0
        %834 = vmatpush1.msra.mxu0 0.0
        %835 = vmatprep.subr.mxu0 0.0
        %836 = vmatpush1.msra.mxu0 0.0
        %837 = vmatprep.subr.mxu0 0.0
        %838 = vmatpush1.msra.mxu0 0.0
        %839 = vmatprep.subr.mxu0 0.0
        %840 = vmatpush1.msra.mxu0 0.0
        %841 = vmatprep.subr.mxu0 0.0
        %842 = vmatpush1.msra.mxu0 0.0
        %843 = vmatprep.subr.mxu0 0.0
        %844 = vmatpush1.msra.mxu0 0.0
        %845 = vmatprep.subr.mxu0 0.0
        %846 = vmatpush1.msra.mxu0 0.0
        %847 = vmatprep.subr.mxu0 0.0
        %848 = vmatpush1.msra.mxu0 0.0
        %849 = vmatprep.subr.mxu0 0.0
        %850 = vmatpush1.msra.mxu0 0.0
        %851 = vmatprep.subr.mxu0 0.0
        %852 = vmatpush1.msra.mxu0 0.0
        %853 = vmatprep.subr.mxu0 0.0
        %854 = vmatpush1.msra.mxu0 0.0
        %855 = vmatprep.subr.mxu0 0.0
        %856 = vmatpush1.msra.mxu0 0.0
        %857 = vmatprep.subr.mxu0 0.0
        %858 = vmatpush1.msra.mxu0 0.0
        %859 = vmatprep.subr.mxu0 0.0
        %860 = vmatpush1.msra.mxu0 0.0
        %861 = vmatprep.subr.mxu0 0.0
        %862 = vmatpush1.msra.mxu0 0.0
        %863 = vmatprep.mubr.f32.mxu0 0.0
        %864 = vmatmul.mubr.f32.gmra.mrb[0].mxu0 %v797
        %v865 = vpop.f32.mrb[0].mxu0
        %v866 = vadd.f32 %v794, %v865
        %v867 = vpop.f32.mrb[0].mxu0
        %868 = vdwg.mxu0
        %vm869 = vcmask 64512
        %v871 = vsel %vm869, %v698, 0
        %v874 = vsel %vm869, %v782, 0
        %876 = vmatprep.subr.mxu0 0.0
        %877 = vmatpush1.xpose.msra.mxu0 %v874
        %878 = vmatprep.subr.mxu0 0.0
        %879 = vmatpush1.xpose.msra.mxu0 0.0
        %880 = vmatprep.subr.mxu0 0.0
        %881 = vmatpush1.xpose.msra.mxu0 0.0
        %882 = vmatprep.subr.mxu0 0.0
        %883 = vmatpush1.xpose.msra.mxu0 0.0
        %884 = vmatprep.subr.mxu0 0.0
        %885 = vmatpush1.xpose.msra.mxu0 0.0
        %886 = vmatprep.subr.mxu0 0.0
        %887 = vmatpush1.xpose.msra.mxu0 0.0
        %888 = vmatprep.subr.mxu0 0.0
        %889 = vmatpush1.xpose.msra.mxu0 0.0
        %890 = vmatprep.subr.mxu0 0.0
        %891 = vmatpush1.xpose.msra.mxu0 0.0
        %892 = vmatprep.subr.mxu0 0.0
        %893 = vmatpush1.xpose.msra.mxu0 0.0
        %894 = vmatprep.subr.mxu0 0.0
        %895 = vmatpush1.xpose.msra.mxu0 0.0
        %896 = vmatprep.subr.mxu0 0.0
        %897 = vmatpush1.xpose.msra.mxu0 0.0
        %898 = vmatprep.subr.mxu0 0.0
        %899 = vmatpush1.xpose.msra.mxu0 0.0
        %900 = vmatprep.subr.mxu0 0.0
        %901 = vmatpush1.xpose.msra.mxu0 0.0
        %902 = vmatprep.subr.mxu0 0.0
        %903 = vmatpush1.xpose.msra.mxu0 0.0
        %904 = vmatprep.subr.mxu0 0.0
        %905 = vmatpush1.xpose.msra.mxu0 0.0
        %906 = vmatprep.subr.mxu0 0.0
        %907 = vmatpush1.xpose.msra.mxu0 0.0
        %908 = vmatprep.subr.mxu0 0.0
        %909 = vmatpush1.xpose.msra.mxu0 0.0
        %910 = vmatprep.subr.mxu0 0.0
        %911 = vmatpush1.xpose.msra.mxu0 0.0
        %912 = vmatprep.subr.mxu0 0.0
        %913 = vmatpush1.xpose.msra.mxu0 0.0
        %914 = vmatprep.subr.mxu0 0.0
        %915 = vmatpush1.xpose.msra.mxu0 0.0
        %916 = vmatprep.subr.mxu0 0.0
        %917 = vmatpush1.xpose.msra.mxu0 0.0
        %918 = vmatprep.subr.mxu0 0.0
        %919 = vmatpush1.xpose.msra.mxu0 0.0
        %920 = vmatprep.subr.mxu0 0.0
        %921 = vmatpush1.xpose.msra.mxu0 0.0
        %922 = vmatprep.subr.mxu0 0.0
        %923 = vmatpush1.xpose.msra.mxu0 0.0
        %924 = vmatprep.subr.mxu0 0.0
        %925 = vmatpush1.xpose.msra.mxu0 0.0
        %926 = vmatprep.subr.mxu0 0.0
        %927 = vmatpush1.xpose.msra.mxu0 0.0
        %928 = vmatprep.subr.mxu0 0.0
        %929 = vmatpush1.xpose.msra.mxu0 0.0
        %930 = vmatprep.subr.mxu0 0.0
        %931 = vmatpush1.xpose.msra.mxu0 0.0
        %932 = vmatprep.subr.mxu0 0.0
        %933 = vmatpush1.xpose.msra.mxu0 0.0
        %934 = vmatprep.subr.mxu0 0.0
        %935 = vmatpush1.xpose.msra.mxu0 0.0
        %936 = vmatprep.subr.mxu0 0.0
        %937 = vmatpush1.xpose.msra.mxu0 0.0
        %938 = vmatprep.subr.mxu0 0.0
        %939 = vmatpush1.xpose.msra.mxu0 0.0
        %940 = vmatprep.mubr.f32.mxu0 0.0
        %941 = vmatmul.mubr.f32.gmra.mrb[0].mxu0 %v871
        %v942 = vpop.f32.mrb[0].mxu0
        %v943 = vadd.f32 0.0, %v942
        %v944 = vpop.f32.mrb[0].mxu0
        %945 = vdwg.mxu0
        %v946 = vmul.f32 %v943, 0.35355338
        %v947 = vsel %vm869, %v946, -inf
        %948 = vmax.xlane.f32.xlu0 %v947
        %v949 = vpop.xlane.xlu0 %948
        %v950 = vsub.f32 %v946, %v949
        %v951 = vmul.f32 %v950, 1.442695
        %v952 = vpow.pop %v951
        %v953 = vsel %vm869, %v952, 0.0
        %954 = vadd.xlane.f32.xlu0 %v953
        %v955 = vpop.xlane.xlu0 %954
        %v956 = vrcp.pop %v955
        %v957 = vmul.f32 %v952, %v956
        %v959 = vsel %vm869, %v957, 0
        %961 = vmatprep.subr.mxu0 0.0
        %962 = vmatpush1.msra.mxu0 %v866
        %963 = vmatprep.subr.mxu0 0.0
        %964 = vmatpush1.msra.mxu0 0.0
        %965 = vmatprep.subr.mxu0 0.0
        %966 = vmatpush1.msra.mxu0 0.0
        %967 = vmatprep.subr.mxu0 0.0
        %968 = vmatpush1.msra.mxu0 0.0
        %969 = vmatprep.subr.mxu0 0.0
        %970 = vmatpush1.msra.mxu0 0.0
        %971 = vmatprep.subr.mxu0 0.0
        %972 = vmatpush1.msra.mxu0 0.0
        %973 = vmatprep.subr.mxu0 0.0
        %974 = vmatpush1.msra.mxu0 0.0
        %975 = vmatprep.subr.mxu0 0.0
        %976 = vmatpush1.msra.mxu0 0.0
        %977 = vmatprep.subr.mxu0 0.0
        %978 = vmatpush1.msra.mxu0 0.0
        %979 = vmatprep.subr.mxu0 0.0
        %980 = vmatpush1.msra.mxu0 0.0
        %981 = vmatprep.subr.mxu0 0.0
        %982 = vmatpush1.msra.mxu0 0.0
        %983 = vmatprep.subr.mxu0 0.0
        %984 = vmatpush1.msra.mxu0 0.0
        %985 = vmatprep.subr.mxu0 0.0
        %986 = vmatpush1.msra.mxu0 0.0
        %987 = vmatprep.subr.mxu0 0.0
        %988 = vmatpush1.msra.mxu0 0.0
        %989 = vmatprep.subr.mxu0 0.0
        %990 = vmatpush1.msra.mxu0 0.0
        %991 = vmatprep.subr.mxu0 0.0
        %992 = vmatpush1.msra.mxu0 0.0
        %993 = vmatprep.subr.mxu0 0.0
        %994 = vmatpush1.msra.mxu0 0.0
        %995 = vmatprep.subr.mxu0 0.0
        %996 = vmatpush1.msra.mxu0 0.0
        %997 = vmatprep.subr.mxu0 0.0
        %998 = vmatpush1.msra.mxu0 0.0
        %999 = vmatprep.subr.mxu0 0.0
        %1000 = vmatpush1.msra.mxu0 0.0
        %1001 = vmatprep.subr.mxu0 0.0
        %1002 = vmatpush1.msra.mxu0 0.0
        %1003 = vmatprep.subr.mxu0 0.0
        %1004 = vmatpush1.msra.mxu0 0.0
        %1005 = vmatprep.subr.mxu0 0.0
        %1006 = vmatpush1.msra.mxu0 0.0
        %1007 = vmatprep.subr.mxu0 0.0
        %1008 = vmatpush1.msra.mxu0 0.0
        %1009 = vmatprep.subr.mxu0 0.0
        %1010 = vmatpush1.msra.mxu0 0.0
        %1011 = vmatprep.subr.mxu0 0.0
        %1012 = vmatpush1.msra.mxu0 0.0
        %1013 = vmatprep.subr.mxu0 0.0
        %1014 = vmatpush1.msra.mxu0 0.0
        %1015 = vmatprep.subr.mxu0 0.0
        %1016 = vmatpush1.msra.mxu0 0.0
        %1017 = vmatprep.subr.mxu0 0.0
        %1018 = vmatpush1.msra.mxu0 0.0
        %1019 = vmatprep.subr.mxu0 0.0
        %1020 = vmatpush1.msra.mxu0 0.0
        %1021 = vmatprep.subr.mxu0 0.0
        %1022 = vmatpush1.msra.mxu0 0.0
        %1023 = vmatprep.subr.mxu0 0.0
        %1024 = vmatpush1.msra.mxu0 0.0
        %1025 = vmatprep.mubr.f32.mxu0 0.0
        %1026 = vmatmul.mubr.f32.gmra.mrb[0].mxu0 %v959
        %v1027 = vpop.f32.mrb[0].mxu0
        %v1028 = vadd.f32 0.0, %v1027
        %v1029 = vpop.f32.mrb[0].mxu0
        %1030 = vdwg.mxu0
        %1031 = vrot.lane.b32.xlu0 %v698, 120
        %v1032 = vpop.permute.xlu0 %1031
        %1033 = vrot.lane.b32.xlu0 %v782, 120
        %v1034 = vpop.permute.xlu0 %1033
        %v1035 = vsel %vm869, %v1032, 0
        %v1037 = vsel %vm869, %v1034, 0
        %1039 = vmatprep.subr.mxu0 0.0
        %1040 = vmatpush1.xpose.msra.mxu0 %v1037
        %1041 = vmatprep.subr.mxu0 0.0
        %1042 = vmatpush1.xpose.msra.mxu0 0.0
        %1043 = vmatprep.subr.mxu0 0.0
        %1044 = vmatpush1.xpose.msra.mxu0 0.0
        %1045 = vmatprep.subr.mxu0 0.0
        %1046 = vmatpush1.xpose.msra.mxu0 0.0
        %1047 = vmatprep.subr.mxu0 0.0
        %1048 = vmatpush1.xpose.msra.mxu0 0.0
        %1049 = vmatprep.subr.mxu0 0.0
        %1050 = vmatpush1.xpose.msra.mxu0 0.0
        %1051 = vmatprep.subr.mxu0 0.0
        %1052 = vmatpush1.xpose.msra.mxu0 0.0
        %1053 = vmatprep.subr.mxu0 0.0
        %1054 = vmatpush1.xpose.msra.mxu0 0.0
        %1055 = vmatprep.subr.mxu0 0.0
        %1056 = vmatpush1.xpose.msra.mxu0 0.0
        %1057 = vmatprep.subr.mxu0 0.0
        %1058 = vmatpush1.xpose.msra.mxu0 0.0
        %1059 = vmatprep.subr.mxu0 0.0
        %1060 = vmatpush1.xpose.msra.mxu0 0.0
        %1061 = vmatprep.subr.mxu0 0.0
        %1062 = vmatpush1.xpose.msra.mxu0 0.0
        %1063 = vmatprep.subr.mxu0 0.0
        %1064 = vmatpush1.xpose.msra.mxu0 0.0
        %1065 = vmatprep.subr.mxu0 0.0
        %1066 = vmatpush1.xpose.msra.mxu0 0.0
        %1067 = vmatprep.subr.mxu0 0.0
        %1068 = vmatpush1.xpose.msra.mxu0 0.0
        %1069 = vmatprep.subr.mxu0 0.0
        %1070 = vmatpush1.xpose.msra.mxu0 0.0
        %1071 = vmatprep.subr.mxu0 0.0
        %1072 = vmatpush1.xpose.msra.mxu0 0.0
        %1073 = vmatprep.subr.mxu0 0.0
        %1074 = vmatpush1.xpose.msra.mxu0 0.0
        %1075 = vmatprep.subr.mxu0 0.0
        %1076 = vmatpush1.xpose.msra.mxu0 0.0
        %1077 = vmatprep.subr.mxu0 0.0
        %1078 = vmatpush1.xpose.msra.mxu0 0.0
        %1079 = vmatprep.subr.mxu0 0.0
        %1080 = vmatpush1.xpose.msra.mxu0 0.0
        %1081 = vmatprep.subr.mxu0 0.0
        %1082 = vmatpush1.xpose.msra.mxu0 0.0
        %1083 = vmatprep.subr.mxu0 0.0
        %1084 = vmatpush1.xpose.msra.mxu0 0.0
        %1085 = vmatprep.subr.mxu0 0.0
        %1086 = vmatpush1.xpose.msra.mxu0 0.0
        %1087 = vmatprep.subr.mxu0 0.0
        %1088 = vmatpush1.xpose.msra.mxu0 0.0
        %1089 = vmatprep.subr.mxu0 0.0
        %1090 = vmatpush1.xpose.msra.mxu0 0.0
        %1091 = vmatprep.subr.mxu0 0.0
        %1092 = vmatpush1.xpose.msra.mxu0 0.0
        %1093 = vmatprep.subr.mxu0 0.0
        %1094 = vmatpush1.xpose.msra.mxu0 0.0
        %1095 = vmatprep.subr.mxu0 0.0
        %1096 = vmatpush1.xpose.msra.mxu0 0.0
        %1097 = vmatprep.subr.mxu0 0.0
        %1098 = vmatpush1.xpose.msra.mxu0 0.0
        %1099 = vmatprep.subr.mxu0 0.0
        %1100 = vmatpush1.xpose.msra.mxu0 0.0
        %1101 = vmatprep.subr.mxu0 0.0
        %1102 = vmatpush1.xpose.msra.mxu0 0.0
        %1103 = vmatprep.mubr.f32.mxu0 0.0
        %1104 = vmatmul.mubr.f32.gmra.mrb[0].mxu0 %v1035
        %v1105 = vpop.f32.mrb[0].mxu0
        %v1106 = vadd.f32 0.0, %v1105
        %v1107 = vpop.f32.mrb[0].mxu0
        %1108 = vdwg.mxu0
        %v1109 = vmul.f32 %v1106, 0.35355338
        %v1110 = vsel %vm869, %v1109, -inf
        %1111 = vmax.xlane.f32.xlu0 %v1110
        %v1112 = vpop.xlane.xlu0 %1111
        %v1113 = vsub.f32 %v1109, %v1112
        %v1114 = vmul.f32 %v1113, 1.442695
        %v1115 = vpow.pop %v1114
        %v1116 = vsel %vm869, %v1115, 0.0
        %1117 = vadd.xlane.f32.xlu0 %v1116
        %v1118 = vpop.xlane.xlu0 %1117
        %v1119 = vrcp.pop %v1118
        %v1120 = vmul.f32 %v1115, %v1119
        %1122 = vrot.lane.b32.xlu0 %v866, 120
        %v1123 = vpop.permute.xlu0 %1122
        %v1126 = vsel %vm869, %v1120, 0
        %1128 = vmatprep.subr.mxu0 0.0
        %1129 = vmatpush1.msra.mxu0 %v1123
        %1130 = vmatprep.subr.mxu0 0.0
        %1131 = vmatpush1.msra.mxu0 0.0
        %1132 = vmatprep.subr.mxu0 0.0
        %1133 = vmatpush1.msra.mxu0 0.0
        %1134 = vmatprep.subr.mxu0 0.0
        %1135 = vmatpush1.msra.mxu0 0.0
        %1136 = vmatprep.subr.mxu0 0.0
        %1137 = vmatpush1.msra.mxu0 0.0
        %1138 = vmatprep.subr.mxu0 0.0
        %1139 = vmatpush1.msra.mxu0 0.0
        %1140 = vmatprep.subr.mxu0 0.0
        %1141 = vmatpush1.msra.mxu0 0.0
        %1142 = vmatprep.subr.mxu0 0.0
        %1143 = vmatpush1.msra.mxu0 0.0
        %1144 = vmatprep.subr.mxu0 0.0
        %1145 = vmatpush1.msra.mxu0 0.0
        %1146 = vmatprep.subr.mxu0 0.0
        %1147 = vmatpush1.msra.mxu0 0.0
        %1148 = vmatprep.subr.mxu0 0.0
        %1149 = vmatpush1.msra.mxu0 0.0
        %1150 = vmatprep.subr.mxu0 0.0
        %1151 = vmatpush1.msra.mxu0 0.0
        %1152 = vmatprep.subr.mxu0 0.0
        %1153 = vmatpush1.msra.mxu0 0.0
        %1154 = vmatprep.subr.mxu0 0.0
        %1155 = vmatpush1.msra.mxu0 0.0
        %1156 = vmatprep.subr.mxu0 0.0
        %1157 = vmatpush1.msra.mxu0 0.0
        %1158 = vmatprep.subr.mxu0 0.0
        %1159 = vmatpush1.msra.mxu0 0.0
        %1160 = vmatprep.subr.mxu0 0.0
        %1161 = vmatpush1.msra.mxu0 0.0
        %1162 = vmatprep.subr.mxu0 0.0
        %1163 = vmatpush1.msra.mxu0 0.0
        %1164 = vmatprep.subr.mxu0 0.0
        %1165 = vmatpush1.msra.mxu0 0.0
        %1166 = vmatprep.subr.mxu0 0.0
        %1167 = vmatpush1.msra.mxu0 0.0
        %1168 = vmatprep.subr.mxu0 0.0
        %1169 = vmatpush1.msra.mxu0 0.0
        %1170 = vmatprep.subr.mxu0 0.0
        %1171 = vmatpush1.msra.mxu0 0.0
        %1172 = vmatprep.subr.mxu0 0.0
        %1173 = vmatpush1.msra.mxu0 0.0
        %1174 = vmatprep.subr.mxu0 0.0
        %1175 = vmatpush1.msra.mxu0 0.0
        %1176 = vmatprep.subr.mxu0 0.0
        %1177 = vmatpush1.msra.mxu0 0.0
        %1178 = vmatprep.subr.mxu0 0.0
        %1179 = vmatpush1.msra.mxu0 0.0
        %1180 = vmatprep.subr.mxu0 0.0
        %1181 = vmatpush1.msra.mxu0 0.0
        %1182 = vmatprep.subr.mxu0 0.0
        %1183 = vmatpush1.msra.mxu0 0.0
        %1184 = vmatprep.subr.mxu0 0.0
        %1185 = vmatpush1.msra.mxu0 0.0
        %1186 = vmatprep.subr.mxu0 0.0
        %1187 = vmatpush1.msra.mxu0 0.0
        %1188 = vmatprep.subr.mxu0 0.0
        %1189 = vmatpush1.msra.mxu0 0.0
        %1190 = vmatprep.subr.mxu0 0.0
        %1191 = vmatpush1.msra.mxu0 0.0
        %1192 = vmatprep.mubr.f32.mxu0 0.0
        %1193 = vmatmul.mubr.f32.gmra.mrb[0].mxu0 %v1126
        %v1194 = vpop.f32.mrb[0].mxu0
        %v1195 = vadd.f32 0.0, %v1194
        %v1196 = vpop.f32.mrb[0].mxu0
        %1197 = vdwg.mxu0
        %1198 = vrot.lane.b32.xlu0 %v698, 112
        %v1199 = vpop.permute.xlu0 %1198
        %1200 = vrot.lane.b32.xlu0 %v782, 112
        %v1201 = vpop.permute.xlu0 %1200
        %v1202 = vsel %vm869, %v1199, 0
        %v1204 = vsel %vm869, %v1201, 0
        %1206 = vmatprep.subr.mxu0 0.0
        %1207 = vmatpush1.xpose.msra.mxu0 %v1204
        %1208 = vmatprep.subr.mxu0 0.0
        %1209 = vmatpush1.xpose.msra.mxu0 0.0
        %1210 = vmatprep.subr.mxu0 0.0
        %1211 = vmatpush1.xpose.msra.mxu0 0.0
        %1212 = vmatprep.subr.mxu0 0.0
        %1213 = vmatpush1.xpose.msra.mxu0 0.0
        %1214 = vmatprep.subr.mxu0 0.0
        %1215 = vmatpush1.xpose.msra.mxu0 0.0
        %1216 = vmatprep.subr.mxu0 0.0
        %1217 = vmatpush1.xpose.msra.mxu0 0.0
        %1218 = vmatprep.subr.mxu0 0.0
        %1219 = vmatpush1.xpose.msra.mxu0 0.0
        %1220 = vmatprep.subr.mxu0 0.0
        %1221 = vmatpush1.xpose.msra.mxu0 0.0
        %1222 = vmatprep.subr.mxu0 0.0
        %1223 = vmatpush1.xpose.msra.mxu0 0.0
        %1224 = vmatprep.subr.mxu0 0.0
        %1225 = vmatpush1.xpose.msra.mxu0 0.0
        %1226 = vmatprep.subr.mxu0 0.0
        %1227 = vmatpush1.xpose.msra.mxu0 0.0
        %1228 = vmatprep.subr.mxu0 0.0
        %1229 = vmatpush1.xpose.msra.mxu0 0.0
        %1230 = vmatprep.subr.mxu0 0.0
        %1231 = vmatpush1.xpose.msra.mxu0 0.0
        %1232 = vmatprep.subr.mxu0 0.0
        %1233 = vmatpush1.xpose.msra.mxu0 0.0
        %1234 = vmatprep.subr.mxu0 0.0
        %1235 = vmatpush1.xpose.msra.mxu0 0.0
        %1236 = vmatprep.subr.mxu0 0.0
        %1237 = vmatpush1.xpose.msra.mxu0 0.0
        %1238 = vmatprep.subr.mxu0 0.0
        %1239 = vmatpush1.xpose.msra.mxu0 0.0
        %1240 = vmatprep.subr.mxu0 0.0
        %1241 = vmatpush1.xpose.msra.mxu0 0.0
        %1242 = vmatprep.subr.mxu0 0.0
        %1243 = vmatpush1.xpose.msra.mxu0 0.0
        %1244 = vmatprep.subr.mxu0 0.0
        %1245 = vmatpush1.xpose.msra.mxu0 0.0
        %1246 = vmatprep.subr.mxu0 0.0
        %1247 = vmatpush1.xpose.msra.mxu0 0.0
        %1248 = vmatprep.subr.mxu0 0.0
        %1249 = vmatpush1.xpose.msra.mxu0 0.0
        %1250 = vmatprep.subr.mxu0 0.0
        %1251 = vmatpush1.xpose.msra.mxu0 0.0
        %1252 = vmatprep.subr.mxu0 0.0
        %1253 = vmatpush1.xpose.msra.mxu0 0.0
        %1254 = vmatprep.subr.mxu0 0.0
        %1255 = vmatpush1.xpose.msra.mxu0 0.0
        %1256 = vmatprep.subr.mxu0 0.0
        %1257 = vmatpush1.xpose.msra.mxu0 0.0
        %1258 = vmatprep.subr.mxu0 0.0
        %1259 = vmatpush1.xpose.msra.mxu0 0.0
        %1260 = vmatprep.subr.mxu0 0.0
        %1261 = vmatpush1.xpose.msra.mxu0 0.0
        %1262 = vmatprep.subr.mxu0 0.0
        %1263 = vmatpush1.xpose.msra.mxu0 0.0
        %1264 = vmatprep.subr.mxu0 0.0
        %1265 = vmatpush1.xpose.msra.mxu0 0.0
        %1266 = vmatprep.subr.mxu0 0.0
        %1267 = vmatpush1.xpose.msra.mxu0 0.0
        %1268 = vmatprep.subr.mxu0 0.0
        %1269 = vmatpush1.xpose.msra.mxu0 0.0
        %1270 = vmatprep.mubr.f32.mxu0 0.0
        %1271 = vmatmul.mubr.f32.gmra.mrb[0].mxu0 %v1202
        %v1272 = vpop.f32.mrb[0].mxu0
        %v1273 = vadd.f32 0.0, %v1272
        %v1274 = vpop.f32.mrb[0].mxu0
        %1275 = vdwg.mxu0
        %v1276 = vmul.f32 %v1273, 0.35355338
        %v1277 = vsel %vm869, %v1276, -inf
        %1278 = vmax.xlane.f32.xlu0 %v1277
        %v1279 = vpop.xlane.xlu0 %1278
        %v1280 = vsub.f32 %v1276, %v1279
        %v1281 = vmul.f32 %v1280, 1.442695
        %v1282 = vpow.pop %v1281
        %v1283 = vsel %vm869, %v1282, 0.0
        %1284 = vadd.xlane.f32.xlu0 %v1283
        %v1285 = vpop.xlane.xlu0 %1284
        %v1286 = vrcp.pop %v1285
        %v1287 = vmul.f32 %v1282, %v1286
        %1288 = vrot.lane.b32.xlu0 %v866, 112
        %v1289 = vpop.permute.xlu0 %1288
        %v1292 = vsel %vm869, %v1287, 0
        %1294 = vmatprep.subr.mxu0 0.0
        %1295 = vmatpush1.msra.mxu0 %v1289
        %1296 = vmatprep.subr.mxu0 0.0
        %1297 = vmatpush1.msra.mxu0 0.0
        %1298 = vmatprep.subr.mxu0 0.0
        %1299 = vmatpush1.msra.mxu0 0.0
        %1300 = vmatprep.subr.mxu0 0.0
        %1301 = vmatpush1.msra.mxu0 0.0
        %1302 = vmatprep.subr.mxu0 0.0
        %1303 = vmatpush1.msra.mxu0 0.0
        %1304 = vmatprep.subr.mxu0 0.0
        %1305 = vmatpush1.msra.mxu0 0.0
        %1306 = vmatprep.subr.mxu0 0.0
        %1307 = vmatpush1.msra.mxu0 0.0
        %1308 = vmatprep.subr.mxu0 0.0
        %1309 = vmatpush1.msra.mxu0 0.0
        %1310 = vmatprep.subr.mxu0 0.0
        %1311 = vmatpush1.msra.mxu0 0.0
        %1312 = vmatprep.subr.mxu0 0.0
        %1313 = vmatpush1.msra.mxu0 0.0
        %1314 = vmatprep.subr.mxu0 0.0
        %1315 = vmatpush1.msra.mxu0 0.0
        %1316 = vmatprep.subr.mxu0 0.0
        %1317 = vmatpush1.msra.mxu0 0.0
        %1318 = vmatprep.subr.mxu0 0.0
        %1319 = vmatpush1.msra.mxu0 0.0
        %1320 = vmatprep.subr.mxu0 0.0
        %1321 = vmatpush1.msra.mxu0 0.0
        %1322 = vmatprep.subr.mxu0 0.0
        %1323 = vmatpush1.msra.mxu0 0.0
        %1324 = vmatprep.subr.mxu0 0.0
        %1325 = vmatpush1.msra.mxu0 0.0
        %1326 = vmatprep.subr.mxu0 0.0
        %1327 = vmatpush1.msra.mxu0 0.0
        %1328 = vmatprep.subr.mxu0 0.0
        %1329 = vmatpush1.msra.mxu0 0.0
        %1330 = vmatprep.subr.mxu0 0.0
        %1331 = vmatpush1.msra.mxu0 0.0
        %1332 = vmatprep.subr.mxu0 0.0
        %1333 = vmatpush1.msra.mxu0 0.0
        %1334 = vmatprep.subr.mxu0 0.0
        %1335 = vmatpush1.msra.mxu0 0.0
        %1336 = vmatprep.subr.mxu0 0.0
        %1337 = vmatpush1.msra.mxu0 0.0
        %1338 = vmatprep.subr.mxu0 0.0
        %1339 = vmatpush1.msra.mxu0 0.0
        %1340 = vmatprep.subr.mxu0 0.0
        %1341 = vmatpush1.msra.mxu0 0.0
        %1342 = vmatprep.subr.mxu0 0.0
        %1343 = vmatpush1.msra.mxu0 0.0
        %1344 = vmatprep.subr.mxu0 0.0
        %1345 = vmatpush1.msra.mxu0 0.0
        %1346 = vmatprep.subr.mxu0 0.0
        %1347 = vmatpush1.msra.mxu0 0.0
        %1348 = vmatprep.subr.mxu0 0.0
        %1349 = vmatpush1.msra.mxu0 0.0
        %1350 = vmatprep.subr.mxu0 0.0
        %1351 = vmatpush1.msra.mxu0 0.0
        %1352 = vmatprep.subr.mxu0 0.0
        %1353 = vmatpush1.msra.mxu0 0.0
        %1354 = vmatprep.subr.mxu0 0.0
        %1355 = vmatpush1.msra.mxu0 0.0
        %1356 = vmatprep.subr.mxu0 0.0
        %1357 = vmatpush1.msra.mxu0 0.0
        %1358 = vmatprep.mubr.f32.mxu0 0.0
        %1359 = vmatmul.mubr.f32.gmra.mrb[0].mxu0 %v1292
        %v1360 = vpop.f32.mrb[0].mxu0
        %v1361 = vadd.f32 0.0, %v1360
        %v1362 = vpop.f32.mrb[0].mxu0
        %1363 = vdwg.mxu0
        %v1364 = vld [vmem:[%s612] sm:$0xff]
        %1365 = vrot.lane.b32.xlu0 %v698, 104
        %v1366 = vpop.permute.xlu0 %1365
        %v1367 = vsel %vm869, %v1366, 0
        %1369 = vmatprep.subr.mxu0 0.0
        %1370 = vmatpush1.msra.mxu0 %v1364
        %1371 = vmatprep.subr.mxu0 0.0
        %1372 = vmatpush1.msra.mxu0 0.0
        %1373 = vmatprep.subr.mxu0 0.0
        %1374 = vmatpush1.msra.mxu0 0.0
        %1375 = vmatprep.subr.mxu0 0.0
        %1376 = vmatpush1.msra.mxu0 0.0
        %1377 = vmatprep.subr.mxu0 0.0
        %1378 = vmatpush1.msra.mxu0 0.0
        %1379 = vmatprep.subr.mxu0 0.0
        %1380 = vmatpush1.msra.mxu0 0.0
        %1381 = vmatprep.subr.mxu0 0.0
        %1382 = vmatpush1.msra.mxu0 0.0
        %1383 = vmatprep.subr.mxu0 0.0
        %1384 = vmatpush1.msra.mxu0 0.0
        %1385 = vmatprep.subr.mxu0 0.0
        %1386 = vmatpush1.msra.mxu0 0.0
        %1387 = vmatprep.subr.mxu0 0.0
        %1388 = vmatpush1.msra.mxu0 0.0
        %1389 = vmatprep.subr.mxu0 0.0
        %1390 = vmatpush1.msra.mxu0 0.0
        %1391 = vmatprep.subr.mxu0 0.0
        %1392 = vmatpush1.msra.mxu0 0.0
        %1393 = vmatprep.subr.mxu0 0.0
        %1394 = vmatpush1.msra.mxu0 0.0
        %1395 = vmatprep.subr.mxu0 0.0
        %1396 = vmatpush1.msra.mxu0 0.0
        %1397 = vmatprep.subr.mxu0 0.0
        %1398 = vmatpush1.msra.mxu0 0.0
        %1399 = vmatprep.subr.mxu0 0.0
        %1400 = vmatpush1.msra.mxu0 0.0
        %1401 = vmatprep.subr.mxu0 0.0
        %1402 = vmatpush1.msra.mxu0 0.0
        %1403 = vmatprep.subr.mxu0 0.0
        %1404 = vmatpush1.msra.mxu0 0.0
        %1405 = vmatprep.subr.mxu0 0.0
        %1406 = vmatpush1.msra.mxu0 0.0
        %1407 = vmatprep.subr.mxu0 0.0
        %1408 = vmatpush1.msra.mxu0 0.0
        %1409 = vmatprep.subr.mxu0 0.0
        %1410 = vmatpush1.msra.mxu0 0.0
        %1411 = vmatprep.subr.mxu0 0.0
        %1412 = vmatpush1.msra.mxu0 0.0
        %1413 = vmatprep.subr.mxu0 0.0
        %1414 = vmatpush1.msra.mxu0 0.0
        %1415 = vmatprep.subr.mxu0 0.0
        %1416 = vmatpush1.msra.mxu0 0.0
        %1417 = vmatprep.subr.mxu0 0.0
        %1418 = vmatpush1.msra.mxu0 0.0
        %1419 = vmatprep.subr.mxu0 0.0
        %1420 = vmatpush1.msra.mxu0 0.0
        %1421 = vmatprep.subr.mxu0 0.0
        %1422 = vmatpush1.msra.mxu0 0.0
        %1423 = vmatprep.subr.mxu0 0.0
        %1424 = vmatpush1.msra.mxu0 0.0
        %1425 = vmatprep.subr.mxu0 0.0
        %1426 = vmatpush1.msra.mxu0 0.0
        %1427 = vmatprep.subr.mxu0 0.0
        %1428 = vmatpush1.msra.mxu0 0.0
        %1429 = vmatprep.subr.mxu0 0.0
        %1430 = vmatpush1.msra.mxu0 0.0
        %1431 = vmatprep.subr.mxu0 0.0
        %1432 = vmatpush1.msra.mxu0 0.0
        %1433 = vmatprep.mubr.f32.mxu0 0.0
        %1434 = vmatmul.mubr.f32.gmra.mrb[0].mxu0 %v1367
        %v1435 = vpop.f32.mrb[0].mxu0
        %v1436 = vadd.f32 0.0, %v1435
        %v1437 = vpop.f32.mrb[0].mxu0
        %1438 = vdwg.mxu0
        %1439 = vrot.lane.b32.xlu0 %v782, 104
        %v1440 = vpop.permute.xlu0 %1439
        %v1442 = vsel %vm869, %v1436, 0
        %v1444 = vsel %vm869, %v1440, 0
        %1446 = vmatprep.subr.mxu0 0.0
        %1447 = vmatpush1.xpose.msra.mxu0 %v1444
        %1448 = vmatprep.subr.mxu0 0.0
        %1449 = vmatpush1.xpose.msra.mxu0 0.0
        %1450 = vmatprep.subr.mxu0 0.0
        %1451 = vmatpush1.xpose.msra.mxu0 0.0
        %1452 = vmatprep.subr.mxu0 0.0
        %1453 = vmatpush1.xpose.msra.mxu0 0.0
        %1454 = vmatprep.subr.mxu0 0.0
        %1455 = vmatpush1.xpose.msra.mxu0 0.0
        %1456 = vmatprep.subr.mxu0 0.0
        %1457 = vmatpush1.xpose.msra.mxu0 0.0
        %1458 = vmatprep.subr.mxu0 0.0
        %1459 = vmatpush1.xpose.msra.mxu0 0.0
        %1460 = vmatprep.subr.mxu0 0.0
        %1461 = vmatpush1.xpose.msra.mxu0 0.0
        %1462 = vmatprep.subr.mxu0 0.0
        %1463 = vmatpush1.xpose.msra.mxu0 0.0
        %1464 = vmatprep.subr.mxu0 0.0
        %1465 = vmatpush1.xpose.msra.mxu0 0.0
        %1466 = vmatprep.subr.mxu0 0.0
        %1467 = vmatpush1.xpose.msra.mxu0 0.0
        %1468 = vmatprep.subr.mxu0 0.0
        %1469 = vmatpush1.xpose.msra.mxu0 0.0
        %1470 = vmatprep.subr.mxu0 0.0
        %1471 = vmatpush1.xpose.msra.mxu0 0.0
        %1472 = vmatprep.subr.mxu0 0.0
        %1473 = vmatpush1.xpose.msra.mxu0 0.0
        %1474 = vmatprep.subr.mxu0 0.0
        %1475 = vmatpush1.xpose.msra.mxu0 0.0
        %1476 = vmatprep.subr.mxu0 0.0
        %1477 = vmatpush1.xpose.msra.mxu0 0.0
        %1478 = vmatprep.subr.mxu0 0.0
        %1479 = vmatpush1.xpose.msra.mxu0 0.0
        %1480 = vmatprep.subr.mxu0 0.0
        %1481 = vmatpush1.xpose.msra.mxu0 0.0
        %1482 = vmatprep.subr.mxu0 0.0
        %1483 = vmatpush1.xpose.msra.mxu0 0.0
        %1484 = vmatprep.subr.mxu0 0.0
        %1485 = vmatpush1.xpose.msra.mxu0 0.0
        %1486 = vmatprep.subr.mxu0 0.0
        %1487 = vmatpush1.xpose.msra.mxu0 0.0
        %1488 = vmatprep.subr.mxu0 0.0
        %1489 = vmatpush1.xpose.msra.mxu0 0.0
        %1490 = vmatprep.subr.mxu0 0.0
        %1491 = vmatpush1.xpose.msra.mxu0 0.0
        %1492 = vmatprep.subr.mxu0 0.0
        %1493 = vmatpush1.xpose.msra.mxu0 0.0
        %1494 = vmatprep.subr.mxu0 0.0
        %1495 = vmatpush1.xpose.msra.mxu0 0.0
        %1496 = vmatprep.subr.mxu0 0.0
        %1497 = vmatpush1.xpose.msra.mxu0 0.0
        %1498 = vmatprep.subr.mxu0 0.0
        %1499 = vmatpush1.xpose.msra.mxu0 0.0
        %1500 = vmatprep.subr.mxu0 0.0
        %1501 = vmatpush1.xpose.msra.mxu0 0.0
        %1502 = vmatprep.subr.mxu0 0.0
        %1503 = vmatpush1.xpose.msra.mxu0 0.0
        %1504 = vmatprep.subr.mxu0 0.0
        %1505 = vmatpush1.xpose.msra.mxu0 0.0
        %1506 = vmatprep.subr.mxu0 0.0
        %1507 = vmatpush1.xpose.msra.mxu0 0.0
        %1508 = vmatprep.subr.mxu0 0.0
        %1509 = vmatpush1.xpose.msra.mxu0 0.0
        %1510 = vmatprep.mubr.f32.mxu0 0.0
        %1511 = vmatmul.mubr.f32.gmra.mrb[0].mxu0 %v1442
        %v1512 = vpop.f32.mrb[0].mxu0
        %v1513 = vadd.f32 0.0, %v1512
        %v1514 = vpop.f32.mrb[0].mxu0
        %1515 = vdwg.mxu0
        %v1516 = vmul.f32 %v1513, 0.35355338
        %1517 = vst.msk [vmem:[%s608] sm:$0xff] %vm869, %v1516
        %v1518 = vsel %vm869, %v1516, -inf
        %1519 = vmax.xlane.f32.xlu0 %v1518
        %v1520 = vpop.xlane.xlu0 %1519
        %v1521 = vsub.f32 %v1516, %v1520
        %v1522 = vmul.f32 %v1521, 1.442695
        %v1523 = vpow.pop %v1522
        %v1524 = vsel %vm869, %v1523, 0.0
        %1525 = vadd.xlane.f32.xlu0 %v1524
        %v1526 = vpop.xlane.xlu0 %1525
        %v1527 = vrcp.pop %v1526
        %v1528 = vmul.f32 %v1523, %v1527
        %1529 = vrot.lane.b32.xlu0 %v866, 104
        %v1530 = vpop.permute.xlu0 %1529
        %v1533 = vsel %vm869, %v1528, 0
        %1535 = vmatprep.subr.mxu0 0.0
        %1536 = vmatpush1.msra.mxu0 %v1530
        %1537 = vmatprep.subr.mxu0 0.0
        %1538 = vmatpush1.msra.mxu0 0.0
        %1539 = vmatprep.subr.mxu0 0.0
        %1540 = vmatpush1.msra.mxu0 0.0
        %1541 = vmatprep.subr.mxu0 0.0
        %1542 = vmatpush1.msra.mxu0 0.0
        %1543 = vmatprep.subr.mxu0 0.0
        %1544 = vmatpush1.msra.mxu0 0.0
        %1545 = vmatprep.subr.mxu0 0.0
        %1546 = vmatpush1.msra.mxu0 0.0
        %1547 = vmatprep.subr.mxu0 0.0
        %1548 = vmatpush1.msra.mxu0 0.0
        %1549 = vmatprep.subr.mxu0 0.0
        %1550 = vmatpush1.msra.mxu0 0.0
        %1551 = vmatprep.subr.mxu0 0.0
        %1552 = vmatpush1.msra.mxu0 0.0
        %1553 = vmatprep.subr.mxu0 0.0
        %1554 = vmatpush1.msra.mxu0 0.0
        %1555 = vmatprep.subr.mxu0 0.0
        %1556 = vmatpush1.msra.mxu0 0.0
        %1557 = vmatprep.subr.mxu0 0.0
        %1558 = vmatpush1.msra.mxu0 0.0
        %1559 = vmatprep.subr.mxu0 0.0
        %1560 = vmatpush1.msra.mxu0 0.0
        %1561 = vmatprep.subr.mxu0 0.0
        %1562 = vmatpush1.msra.mxu0 0.0
        %1563 = vmatprep.subr.mxu0 0.0
        %1564 = vmatpush1.msra.mxu0 0.0
        %1565 = vmatprep.subr.mxu0 0.0
        %1566 = vmatpush1.msra.mxu0 0.0
        %1567 = vmatprep.subr.mxu0 0.0
        %1568 = vmatpush1.msra.mxu0 0.0
        %1569 = vmatprep.subr.mxu0 0.0
        %1570 = vmatpush1.msra.mxu0 0.0
        %1571 = vmatprep.subr.mxu0 0.0
        %1572 = vmatpush1.msra.mxu0 0.0
        %1573 = vmatprep.subr.mxu0 0.0
        %1574 = vmatpush1.msra.mxu0 0.0
        %1575 = vmatprep.subr.mxu0 0.0
        %1576 = vmatpush1.msra.mxu0 0.0
        %1577 = vmatprep.subr.mxu0 0.0
        %1578 = vmatpush1.msra.mxu0 0.0
        %1579 = vmatprep.subr.mxu0 0.0
        %1580 = vmatpush1.msra.mxu0 0.0
        %1581 = vmatprep.subr.mxu0 0.0
        %1582 = vmatpush1.msra.mxu0 0.0
        %1583 = vmatprep.subr.mxu0 0.0
        %1584 = vmatpush1.msra.mxu0 0.0
        %1585 = vmatprep.subr.mxu0 0.0
        %1586 = vmatpush1.msra.mxu0 0.0
        %1587 = vmatprep.subr.mxu0 0.0
        %1588 = vmatpush1.msra.mxu0 0.0
        %1589 = vmatprep.subr.mxu0 0.0
        %1590 = vmatpush1.msra.mxu0 0.0
        %1591 = vmatprep.subr.mxu0 0.0
        %1592 = vmatpush1.msra.mxu0 0.0
        %1593 = vmatprep.subr.mxu0 0.0
        %1594 = vmatpush1.msra.mxu0 0.0
        %1595 = vmatprep.subr.mxu0 0.0
        %1596 = vmatpush1.msra.mxu0 0.0
        %1597 = vmatprep.subr.mxu0 0.0
        %1598 = vmatpush1.msra.mxu0 0.0
        %1599 = vmatprep.mubr.f32.mxu0 0.0
        %1600 = vmatmul.mubr.f32.gmra.mrb[0].mxu0 %v1533
        %v1601 = vpop.f32.mrb[0].mxu0
        %v1602 = vadd.f32 0.0, %v1601
        %v1603 = vpop.f32.mrb[0].mxu0
        %1604 = vdwg.mxu0
        %1606 = vrot.lane.b32.xlu0 %v1195, 8
        %v1607 = vpop.permute.xlu0 %1606
        %1610 = vrot.lane.b32.xlu0 %v1361, 16
        %v1611 = vpop.permute.xlu0 %1610
        %1614 = vrot.lane.b32.xlu0 %v1602, 24
        %v1615 = vpop.permute.xlu0 %1614
        %v1617 = vsel %vm869, %v1028, %v1607
        %vm1618 = vcmask 130048
        %v1619 = vsel %vm1618, %v1617, %v1611
        %vm1620 = vcmask 195584
        %v1621 = vsel %vm1620, %v1619, %v1615
        %v1622 = vld [vmem:[#allocation13] sm:$0xff]
        %v1623 = vld [vmem:[#allocation13 + $0x8] sm:$0xff]
        %v1624 = vld [vmem:[#allocation13 + $0x10] sm:$0xff]
        %v1625 = vld [vmem:[#allocation13 + $0x18] sm:$0xff]
        %v1626 = vld [vmem:[%s10] sm:$0x1]
        %v1628 = vlaneseq
        %v1629 = vshrl.u32 %v1628, 7
        %v1630 = vsub.s32 0, %v1629
        %v1631 = vrot.slane %v1626, %v1630
        %v1634 = vsel %vm627, %v1621, 0
        %1636 = vmatprep.subr.mxu0 0.0
        %1637 = vmatpush1.msra.mxu0 %v1622
        %1638 = vmatprep.subr.mxu0 0.0
        %1639 = vmatpush1.msra.mxu0 %v1623
        %1640 = vmatprep.subr.mxu0 0.0
        %1641 = vmatpush1.msra.mxu0 %v1624
        %1642 = vmatprep.subr.mxu0 0.0
        %1643 = vmatpush1.msra.mxu0 %v1625
        %1644 = vmatprep.subr.mxu0 0.0
        %1645 = vmatpush1.msra.mxu0 0.0
        %1646 = vmatprep.subr.mxu0 0.0
        %1647 = vmatpush1.msra.mxu0 0.0
        %1648 = vmatprep.subr.mxu0 0.0
        %1649 = vmatpush1.msra.mxu0 0.0
        %1650 = vmatprep.subr.mxu0 0.0
        %1651 = vmatpush1.msra.mxu0 0.0
        %1652 = vmatprep.subr.mxu0 0.0
        %1653 = vmatpush1.msra.mxu0 0.0
        %1654 = vmatprep.subr.mxu0 0.0
        %1655 = vmatpush1.msra.mxu0 0.0
        %1656 = vmatprep.subr.mxu0 0.0
        %1657 = vmatpush1.msra.mxu0 0.0
        %1658 = vmatprep.subr.mxu0 0.0
        %1659 = vmatpush1.msra.mxu0 0.0
        %1660 = vmatprep.subr.mxu0 0.0
        %1661 = vmatpush1.msra.mxu0 0.0
        %1662 = vmatprep.subr.mxu0 0.0
        %1663 = vmatpush1.msra.mxu0 0.0
        %1664 = vmatprep.subr.mxu0 0.0
        %1665 = vmatpush1.msra.mxu0 0.0
        %1666 = vmatprep.subr.mxu0 0.0
        %1667 = vmatpush1.msra.mxu0 0.0
        %1668 = vmatprep.subr.mxu0 0.0
        %1669 = vmatpush1.msra.mxu0 0.0
        %1670 = vmatprep.subr.mxu0 0.0
        %1671 = vmatpush1.msra.mxu0 0.0
        %1672 = vmatprep.subr.mxu0 0.0
        %1673 = vmatpush1.msra.mxu0 0.0
        %1674 = vmatprep.subr.mxu0 0.0
        %1675 = vmatpush1.msra.mxu0 0.0
        %1676 = vmatprep.subr.mxu0 0.0
        %1677 = vmatpush1.msra.mxu0 0.0
        %1678 = vmatprep.subr.mxu0 0.0
        %1679 = vmatpush1.msra.mxu0 0.0
        %1680 = vmatprep.subr.mxu0 0.0
        %1681 = vmatpush1.msra.mxu0 0.0
        %1682 = vmatprep.subr.mxu0 0.0
        %1683 = vmatpush1.msra.mxu0 0.0
        %1684 = vmatprep.subr.mxu0 0.0
        %1685 = vmatpush1.msra.mxu0 0.0
        %1686 = vmatprep.subr.mxu0 0.0
        %1687 = vmatpush1.msra.mxu0 0.0
        %1688 = vmatprep.subr.mxu0 0.0
        %1689 = vmatpush1.msra.mxu0 0.0
        %1690 = vmatprep.subr.mxu0 0.0
        %1691 = vmatpush1.msra.mxu0 0.0
        %1692 = vmatprep.subr.mxu0 0.0
        %1693 = vmatpush1.msra.mxu0 0.0
        %1694 = vmatprep.subr.mxu0 0.0
        %1695 = vmatpush1.msra.mxu0 0.0
        %1696 = vmatprep.subr.mxu0 0.0
        %1697 = vmatpush1.msra.mxu0 0.0
        %1698 = vmatprep.subr.mxu0 0.0
        %1699 = vmatpush1.msra.mxu0 0.0
        %1700 = vmatprep.mubr.f32.mxu0 0.0
        %1701 = vmatmul.mubr.f32.gmra.mrb[0].mxu0 %v1634
        %v1702 = vpop.f32.mrb[0].mxu0
        %v1703 = vadd.f32 %v1631, %v1702
        %v1704 = vpop.f32.mrb[0].mxu0
        %1705 = vdwg.mxu0
        %1706 = vst.msk [vmem:[%s601] sm:$0xff] %vm627, %v1703
        %s1707 = sand.u32 %s319, 1
        %s1708 = scalar_lea.sflag [#allocation4], %s1707
        %s1709 = sand.u32 %s319, 1
        %s1710 = smul.addr %s1709, 8
        %s1711 = scalar_lea.vmem [#allocation14], %s1710
        %s1712 = sand.u32 %s345, 1
        %s1713 = scalar_lea.sflag [#allocation16], %s1712
        %s1714 = sand.u32 %s345, 1
        %s1715 = smul.addr %s1714, 8
        %s1716 = scalar_lea.vmem [#allocation15], %s1715
        // Predicated region
        $region97: #{tpu_custom_call.1} parent=67 // pred_check
          %p1717 = pneg %p329
        $region98: #{tpu_custom_call.1} parent=67 // pred_check_branch
          %1719 = sbr.rel (%p1717) target = $region100
        $region99: #{tpu_custom_call.1} parent=67 // pred_region
          %s1721 = ssub.s32 128, 128
          %1722 = vsyncadd %s1708, %s1721
          %s1723 = smul.addr %s39, 128
          %s1724 = scalar_lea.hbm %s12, %s1723
          %s1726 = sshll.u32 %s1711, 4
          %s1727 = int_to_ptr.vmem [resolvable:$true] %s1726
          %1729 = dma.vmem_to_hbm [thread:$0]  %s1727, 128, %s1724, %s1708
        $region100: #{tpu_custom_call.1} parent=67 // pred_fallthru
          _
        // Predicated region
        $region101: #{tpu_custom_call.1} parent=67 // pred_check
          %p1730 = pneg %p355
        $region102: #{tpu_custom_call.1} parent=67 // pred_check_branch
          %1732 = sbr.rel (%p1730) target = $region104
        $region103: #{tpu_custom_call.1} parent=67 // pred_region
          %s1734 = ssub.s32 128, 128
          %1735 = vsyncadd %s1713, %s1734
          %s1736 = smul.addr %s39, 128
          %s1737 = scalar_lea.hbm %s13, %s1736
          %s1739 = sshll.u32 %s1716, 4
          %s1740 = int_to_ptr.vmem [resolvable:$true] %s1739
          %1742 = dma.vmem_to_hbm [thread:$0]  %s1740, 128, %s1737, %s1713
        $region104: #{tpu_custom_call.1} parent=67 // pred_fallthru
          _
      $region68: #{tpu_custom_call.1} parent=5 // pred_fallthru
        _
      %p1743 = scmp.le.s32.totalorder 2, %s34
      // Predicated region
      $region105: #{tpu_custom_call.1} parent=5 // pred_check
        %p1744 = pneg %p1743
      $region106: #{tpu_custom_call.1} parent=5 // pred_check_branch
        %1746 = sbr.rel (%p1744) target = $region108
      $region107: #{tpu_custom_call.1} parent=5 // pred_region
        %s1747 = ssub.s32 %s34, 2
        // Predicated region
        $region109: #{tpu_custom_call.1} parent=107 // pred_check
          %p1748 = pneg %p335
        $region110: #{tpu_custom_call.1} parent=107 // pred_check_branch
          %1750 = sbr.rel (%p1748) target = $region112
        $region111: #{tpu_custom_call.1} parent=107 // pred_region
          %s1751 = sand.u32 %s320, 1
          %s1752 = scalar_lea.sflag [#allocation4], %s1751
          %s1753 = sand.u32 %s320, 1
          %s1754 = smul.addr %s1753, 8
          %s1755 = scalar_lea.vmem [#allocation14], %s1754
          %1756 = dma.done %s1752, 128
        $region112: #{tpu_custom_call.1} parent=107 // pred_fallthru
          _
        // Predicated region
        $region113: #{tpu_custom_call.1} parent=107 // pred_check
          %p1757 = pneg %p361
        $region114: #{tpu_custom_call.1} parent=107 // pred_check_branch
          %1759 = sbr.rel (%p1757) target = $region116
        $region115: #{tpu_custom_call.1} parent=107 // pred_region
          %s1760 = sand.u32 %s346, 1
          %s1761 = scalar_lea.sflag [#allocation16], %s1760
          %s1762 = sand.u32 %s346, 1
          %s1763 = smul.addr %s1762, 8
          %s1764 = scalar_lea.vmem [#allocation15], %s1763
          %1765 = dma.done %s1761, 128
        $region116: #{tpu_custom_call.1} parent=107 // pred_fallthru
          _
      $region108: #{tpu_custom_call.1} parent=5 // pred_fallthru
        _
    $region6: #{tpu_custom_call.1} parent=1 // loop_footer
      %s38 = sadd.s32 1, %s34
    $region7: #{tpu_custom_call.1} parent=1 // loop_footer_branch
      %33 = sbr.rel target = $region3
    $region8: #{tpu_custom_call.1} parent=1 // loop_exit
      _
    %1766 = vsyncpa [#allocation3], 1
    %s1767 = scalar_lea.sflag [#allocation3], 1
    %1768 = vsyncpa %s1767, 1
    %1769 = vsyncpa [#allocation6], 1
    %s1770 = scalar_lea.sflag [#allocation6], 1
    %1771 = vsyncpa %s1770, 1
    %1772 = vsyncpa [#allocation9], 1
    %1773 = vsyncpa [#allocation12], 1
    %1774 = vsyncpa [#allocation4], 1
    %s1775 = scalar_lea.sflag [#allocation4], 1
    %1776 = vsyncpa %s1775, 1
    %1777 = vsyncpa [#allocation16], 1
    %s1778 = scalar_lea.sflag [#allocation16], 1
    %1779 = vsyncpa %s1778, 1

</llo_original>
